<compile_context>
chip_gen: v5e
topology: v5e:2x2
jax: 0.10.0
libtpu: 0.0.40
codegen_flags: <defaults>
</compile_context>

<pallas_src>
import jax
import jax.numpy as jnp
from jax.experimental import pallas as pl
from jax.experimental.pallas import tpu as pltpu


# ----------------------------------------------------------------------------- helpers
_SQRT_2_OVER_PI = 0.7978845608028654
_ROW_OFF = 8          # aligned write offset inside the padded scratches


def _gelu_tanh(x):
    # tanh-form GELU (max abs err vs exact erf GELU ~3e-4); tanh lowers to the EUP.
    return 0.5 * x * (1.0 + jnp.tanh(_SQRT_2_OVER_PI * (x + 0.044715 * x * x * x)))


def _sigmoid(x):
    return 1.0 / (1.0 + jnp.exp(-x))


# ----------------------------------------------------------------------------- kernel
def afc_kernel(xp_ref, mask_ref,
               bn1s_ref, bn1b_ref,
               b1_ref, c1s_ref, c1b_ref,
               wd1_ref, d1s_ref, d1b_ref,
               wd2_ref, d2s_ref, d2b_ref,
               d3m_ref, d3s_ref, d3b_ref,
               eblk_ref, p_ref, q_ref,
               bn2s_ref, bn2b_ref, b2_ref,
               out_ref,
               ylo_ref, tpad_ref, spad_ref, brcat_ref):
    f32 = jnp.float32
    bf16 = jnp.bfloat16
    MP = xp_ref.shape[0]          # BT * (H + 2) rows (BT images, each with halos)
    MI = MP - 2                   # rows of every intermediate / matmul M dimension
    WC2 = tpad_ref.shape[1]       # W * (nIn // 2) lanes
    BT = p_ref.shape[0]           # images per grid step
    OFF = _ROW_OFF

    # Re-zero the scratch border rows every step with aligned 2-row stores.  (Not
    # gated on program_id==0: with "parallel" semantics each core has its own
    # scratch and may never run step 0.)  Interior writes never touch these rows.
    tpad_ref[OFF - 2:OFF, :] = jnp.zeros((2, WC2), f32)
    tpad_ref[OFF + MI:OFF + MI + 2, :] = jnp.zeros((2, WC2), f32)
    spad_ref[OFF - 2:OFF, :] = jnp.zeros((2, WC2), bf16)
    spad_ref[OFF + MI:OFF + MI + 2, :] = jnp.zeros((2, WC2), bf16)

    mask_full = mask_ref[...]                 # (MP, 1): 1 on interior rows, 0 on halos
    mask_int = mask_ref[1:MP - 1, :]          # (MI, 1)

    # --- bn_relu_1; halo rows forced to exactly 0 (= the conv's zero padding) -------
    yp = _gelu_tanh(xp_ref[...] * bn1s_ref[...] + bn1b_ref[...]) * mask_full
    ylo_ref[...] = yp.astype(bf16)            # single aligned bf16 store, fed to MXU

    # --- conv3x3 (nIn -> nIn//2): 3 banded bf16 MXU matmuls over all BT images ------
    acc = jnp.dot(ylo_ref[0:MI, :], b1_ref[0], preferred_element_type=f32)
    acc = acc + jnp.dot(ylo_ref[1:MI + 1, :], b1_ref[1], preferred_element_type=f32)
    acc = acc + jnp.dot(ylo_ref[2:MI + 2, :], b1_ref[2], preferred_element_type=f32)
    # mask_int zeroes the rows that straddle image boundaries inside the slab
    t = _gelu_tanh(acc * c1s_ref[...] + c1b_ref[...]) * mask_int
    tpad_ref[OFF:OFF + MI, :] = t

    # --- depthwise (3,1) convs on the VPU (f32), operands from the padded scratch ---
    s0 = tpad_ref[OFF - 1:OFF - 1 + MI, :]
    s1 = tpad_ref[OFF:OFF + MI, :]
    s2 = tpad_ref[OFF + 1:OFF + 1 + MI, :]
    br1 = _gelu_tanh((s0 * wd1_ref[0:1, :] + s1 * wd1_ref[1:2, :] + s2 * wd1_ref[2:3, :])
                     * d1s_ref[...] + d1b_ref[...])
    br2 = _gelu_tanh((s0 * wd2_ref[0:1, :] + s1 * wd2_ref[1:2, :] + s2 * wd2_ref[2:3, :])
                     * d2s_ref[...] + d2b_ref[...])

    # --- depthwise (1,3) on branch 2: banded-diagonal bf16 MXU matmul ----------------
    br2 = jnp.dot(br2.astype(bf16), d3m_ref[...], preferred_element_type=f32)
    br2 = _gelu_tanh(br2 * d3s_ref[...] + d3b_ref[...])

    # --- fused two-branch ECA gates: per-image pooling matmul -> block-diagonal
    #     (avg-over-W + channel conv1d) matmul -> sigmoid -> per-row expansion --------
    brcat_ref[:, 0:WC2] = br1.astype(bf16)
    brcat_ref[:, WC2:2 * WC2] = br2.astype(bf16)
    pooled = jnp.dot(p_ref[...], brcat_ref[...], preferred_element_type=f32)   # (BT, 2*WC2)
    gates = _sigmoid(jnp.dot(pooled.astype(bf16), eblk_ref[...],
                             preferred_element_type=f32)).astype(bf16)
    if BT == 1:
        grows = jnp.broadcast_to(gates.astype(f32), (MI, 2 * WC2))
    else:
        grows = jnp.dot(q_ref[...], gates, preferred_element_type=f32)         # (MI, 2*WC2)
    br = br1 * grows[:, 0:WC2] + br2 * grows[:, WC2:2 * WC2]

    # --- bn_relu_2 + conv3x3_2 (nIn//2 -> nIn) + residual ----------------------------
    sact = _gelu_tanh(br * bn2s_ref[...] + bn2b_ref[...]) * mask_int
    spad_ref[OFF:OFF + MI, :] = sact.astype(bf16)       # single aligned bf16 store
    o = jnp.dot(spad_ref[OFF - 1:OFF - 1 + MI, :], b2_ref[0], preferred_element_type=f32)
    o = o + jnp.dot(spad_ref[OFF:OFF + MI, :], b2_ref[1], preferred_element_type=f32)
    o = o + jnp.dot(spad_ref[OFF + 1:OFF + 1 + MI, :], b2_ref[2], preferred_element_type=f32)
    # lane-dense store of the interior rows; padded rows are discarded in the wrapper
    out_ref[1:MP - 1, :] = o + xp_ref[1:MP - 1, :]


# ----------------------------------------------------------------------------- packing
def _pick_images_per_step(B, HP, target_rows=256):
    """Images per grid step: aim for ~target_rows MXU rows, keep >=2 grid steps
    (megacore sharding on v7x) whenever B >= 2, and require B % BT == 0."""
    bt = max(1, min(B, max(1, target_rows // HP)))
    while B % bt:
        bt -= 1
    if B >= 2 and B // bt < 2:
        bt = max(1, bt // 2)
        while B % bt:
            bt -= 1
    return bt


def _pack_kernel_params(p, W, H, BT):
    """Convert module parameters to the fused lane-dense (lane = w*C + c) layout."""
    f32, bf16 = jnp.float32, jnp.bfloat16
    Cin, C2 = p['w1'].shape[2], p['w1'].shape[3]
    HP = H + 2
    MP = BT * HP
    MI = MP - 2

    # For a fixed vertical tap d, the full horizontal 3-tap conv becomes one banded
    # (W*Cin_conv, W*Cout_conv) matmul; W-edge zero padding is baked into the band.
    wi = jnp.arange(W)[:, None, None]
    wo = jnp.arange(W)[None, :, None]
    dj = jnp.arange(3)[None, None, :]
    sel = (wi - wo + 1 == dj).astype(f32)                               # (W, W, 3)

    B1 = jnp.einsum('pqj,djco->dpcqo', sel, p['w1']).reshape(3, W * Cin, W * C2)
    B2 = jnp.einsum('pqj,djco->dpcqo', sel, p['w2']).reshape(3, W * C2, W * Cin)
    D3 = jnp.einsum('pqj,jc,ce->pcqe', sel, p['wd3'],
                    jnp.eye(C2, dtype=f32)).reshape(W * C2, W * C2)

    def eca_mat(w):
        r = jnp.arange(C2)[:, None]
        c = jnp.arange(C2)[None, :]
        k1d = (jnp.where(r == c - 1, w[0], 0.0) + jnp.where(r == c, w[1], 0.0)
               + jnp.where(r == c + 1, w[2], 0.0))
        return jnp.tile(k1d / W, (W, W))      # fuses avg-over-W + channel conv1d

    E1, E2 = eca_mat(p['eca1']), eca_mat(p['eca2'])
    Z = jnp.zeros_like(E1)
    Eblk = jnp.concatenate([jnp.concatenate([E1, Z], axis=1),
                            jnp.concatenate([Z, E2], axis=1)], axis=0)

    # Per-image pooling / row-expansion selectors and the interior row mask.
    rows = jnp.arange(MI) + 1                                   # padded row index
    img = rows // HP
    within = rows % HP
    interior = ((within >= 1) & (within <= H)).astype(f32)
    P = ((jnp.arange(BT)[:, None] == img[None, :]).astype(f32)
         * interior[None, :] / float(H))                        # (BT, MI)
    Q = (img[:, None] == jnp.arange(BT)[None, :]).astype(f32)   # (MI, BT)
    wrow = jnp.arange(MP) % HP
    mask = ((wrow >= 1) & (wrow <= H)).astype(f32).reshape(MP, 1)

    tile_w = lambda a: jnp.tile(a, (1, W))
    return dict(
        B1=B1.astype(bf16), B2=B2.astype(bf16), D3=D3.astype(bf16),
        Eblk=Eblk.astype(bf16), P=P.astype(bf16), Q=Q.astype(bf16), mask=mask,
        bn1_s=tile_w(p['bn1_s']), bn1_b=tile_w(p['bn1_b']),
        c1_s=tile_w(p['c1_s']), c1_b=tile_w(p['c1_b']),
        wd1=tile_w(p['wd1']), d1_s=tile_w(p['d1_s']), d1_b=tile_w(p['d1_b']),
        wd2=tile_w(p['wd2']), d2_s=tile_w(p['d2_s']), d2_b=tile_w(p['d2_b']),
        d3_s=tile_w(p['d3_s']), d3_b=tile_w(p['d3_b']),
        bn2_s=tile_w(p['bn2_s']), bn2_b=tile_w(p['bn2_b']),
    )


# ----------------------------------------------------------------------------- wrapper
def afc_forward(x_nchw, p, *, images_per_step=None):
    B, Cin, H, W = x_nchw.shape
    C2 = Cin // 2
    HP = H + 2
    BT = images_per_step if images_per_step is not None else _pick_images_per_step(B, HP)
    assert B % BT == 0
    G = B // BT
    MP = BT * HP
    MI = MP - 2
    WCIN = W * Cin
    WC2 = W * C2

    kp = _pack_kernel_params(p, W, H, BT)

    # NCHW -> NHWC -> fused lane-dense rows; each image keeps its own zero halo rows.
    x_f = jnp.transpose(x_nchw, (0, 2, 3, 1)).astype(jnp.float32).reshape(B, H, WCIN)
    xp = jnp.pad(x_f, ((0, 0), (1, 1), (0, 0))).reshape(G, MP, WCIN)

    def const(shape):
        zeros = (0,) * len(shape)
        return pl.BlockSpec(shape, lambda g, _z=zeros: _z)

    in_specs = [
        pl.BlockSpec((None, MP, WCIN), lambda g: (g, 0, 0)),     # padded input slab
        const((MP, 1)),                                          # interior row mask
        const((1, WCIN)), const((1, WCIN)),                      # bn_relu_1
        const((3, WCIN, WC2)),                                   # conv3x3 bands (bf16)
        const((1, WC2)), const((1, WC2)),                        # conv3x3 BN
        const((3, WC2)), const((1, WC2)), const((1, WC2)),       # dconv3x1
        const((3, WC2)), const((1, WC2)), const((1, WC2)),       # ddconv3x1
        const((WC2, WC2)), const((1, WC2)), const((1, WC2)),     # ddconv1x3 band
        const((2 * WC2, 2 * WC2)),                               # fused ECA block-diag
        const((BT, MI)), const((MI, BT)),                        # pooling / expansion
        const((1, WC2)), const((1, WC2)),                        # bn_relu_2
        const((3, WC2, WCIN)),                                   # conv3x3_2 bands
    ]

    out = pl.pallas_call(
        afc_kernel,
        out_shape=jax.ShapeDtypeStruct((G, MP, WCIN), jnp.float32),
        grid=(G,),
        in_specs=in_specs,
        out_specs=pl.BlockSpec((None, MP, WCIN), lambda g: (g, 0, 0)),
        scratch_shapes=[
            pltpu.VMEM((MP, WCIN), jnp.bfloat16),                 # bf16 conv1 LHS
            pltpu.VMEM((_ROW_OFF + MI + 2, WC2), jnp.float32),    # padded t (VPU)
            pltpu.VMEM((_ROW_OFF + MI + 2, WC2), jnp.bfloat16),   # padded s (conv2 LHS)
            pltpu.VMEM((MI, 2 * WC2), jnp.bfloat16),              # ECA pooled operands
        ],
        compiler_params=pltpu.CompilerParams(
            dimension_semantics=("parallel",),                    # megacore on v7x
            vmem_limit_bytes=32 * 1024 * 1024),
    )(xp, kp['mask'],
      kp['bn1_s'], kp['bn1_b'],
      kp['B1'], kp['c1_s'], kp['c1_b'],
      kp['wd1'], kp['d1_s'], kp['d1_b'],
      kp['wd2'], kp['d2_s'], kp['d2_b'],
      kp['D3'], kp['d3_s'], kp['d3_b'],
      kp['Eblk'], kp['P'], kp['Q'],
      kp['bn2_s'], kp['bn2_b'],
      kp['B2'])

    out_nhwc = out.reshape(B, HP, W, Cin)[:, 1:H + 1]            # drop padded rows
    return jnp.transpose(out_nhwc, (0, 3, 1, 2))                 # -> NCHW


# ----------------------------------------------------------------------------- params
def init_params(n_in, key):
    assert n_in % 2 == 0
    c2 = n_in // 2
    keys = jax.random.split(key, 13)

    def bn_fold(k, c):
        k1, k2, k3, k4 = jax.random.split(k, 4)
        gamma = jax.random.uniform(k1, (1, c), jnp.float32, 0.5, 1.5)
        beta = 0.1 * jax.random.normal(k2, (1, c), jnp.float32)
        mean = 0.1 * jax.random.normal(k3, (1, c), jnp.float32)
        var = jax.random.uniform(k4, (1, c), jnp.float32, 0.5, 1.5)
        scale = gamma / jnp.sqrt(var + 1e-3)          # BatchNorm2d eps=0.001
        shift = beta - mean * scale
        return scale, shift

    p = {}
    p['bn1_s'], p['bn1_b'] = bn_fold(keys[0], n_in)
    p['w1'] = jax.random.normal(keys[1], (3, 3, n_in, c2), jnp.float32) / jnp.sqrt(9.0 * n_in)
    p['c1_s'], p['c1_b'] = bn_fold(keys[2], c2)
    p['wd1'] = jax.random.normal(keys[3], (3, c2), jnp.float32) / jnp.sqrt(3.0)
    p['d1_s'], p['d1_b'] = bn_fold(keys[4], c2)
    p['wd2'] = jax.random.normal(keys[5], (3, c2), jnp.float32) / jnp.sqrt(3.0)
    p['d2_s'], p['d2_b'] = bn_fold(keys[6], c2)
    p['wd3'] = jax.random.normal(keys[7], (3, c2), jnp.float32) / jnp.sqrt(3.0)
    p['d3_s'], p['d3_b'] = bn_fold(keys[8], c2)
    p['eca1'] = jax.random.normal(keys[9], (3,), jnp.float32) / jnp.sqrt(3.0)
    p['eca2'] = jax.random.normal(keys[10], (3,), jnp.float32) / jnp.sqrt(3.0)
    p['bn2_s'], p['bn2_b'] = bn_fold(keys[11], c2)
    p['w2'] = jax.random.normal(keys[12], (3, 3, c2, n_in), jnp.float32) / jnp.sqrt(9.0 * c2)
    return p


# ----------------------------------------------------------------------------- reference
def afc_reference(x_nhwc, p, *, exact=True):
    """Pure-JAX reference.  exact=True: erf GELU + f32 convs/ECA (PyTorch semantics).
    exact=False: numerics matched to the kernel (tanh GELU, bf16 conv/ECA operands)."""
    dn = ('NHWC', 'HWIO', 'NHWC')
    c2 = p['w1'].shape[-1]
    W = x_nhwc.shape[2]
    f32, bf16 = jnp.float32, jnp.bfloat16
    act = (lambda v: jax.nn.gelu(v, approximate=False)) if exact else _gelu_tanh
    conv_dt = f32 if exact else bf16

    def bn_act(v, s, b):
        return act(v * s + b)

    def conv3x3(v, w):
        return jax.lax.conv_general_dilated(
            v.astype(conv_dt), w.astype(conv_dt), (1, 1), [(1, 1), (1, 1)],
            dimension_numbers=dn, preferred_element_type=f32)

    def dw(v, wd, kh, kw, pad, dt=f32):
        w = wd.reshape(kh, kw, 1, c2)
        return jax.lax.conv_general_dilated(
            v.astype(dt), w.astype(dt), (1, 1), pad, dimension_numbers=dn,
            feature_group_count=c2, preferred_element_type=f32)

    def eca_exact(v, w):
        pc = jnp.mean(v, axis=(1, 2))
        pp = jnp.pad(pc, ((0, 0), (1, 1)))
        g = w[0] * pp[:, :-2] + w[1] * pp[:, 1:-1] + w[2] * pp[:, 2:]
        return v * _sigmoid(g)[:, None, None, :]

    def eca_match(v, w):
        # mirrors the kernel: bf16 pooled operands, bf16 (k/W) weights, f32 accumulate,
        # gate rounded to bf16 before the multiply.
        vb = v.astype(bf16).astype(f32)
        pooled = jnp.mean(vb, axis=1)                               # (B, W, C)
        pooledb = pooled.astype(bf16).astype(f32)
        kw = (w / W).astype(bf16).astype(f32)
        pp = jnp.pad(pooledb, ((0, 0), (0, 0), (1, 1)))
        g = jnp.sum(kw[0] * pp[..., :-2] + kw[1] * pp[..., 1:-1] + kw[2] * pp[..., 2:],
                    axis=1)                                         # (B, C)
        gate = _sigmoid(g).astype(bf16).astype(f32)
        return v * gate[:, None, None, :]

    eca = eca_exact if exact else eca_match

    y = bn_act(x_nhwc, p['bn1_s'], p['bn1_b'])
    t = bn_act(conv3x3(y, p['w1']), p['c1_s'], p['c1_b'])
    br1 = bn_act(dw(t, p['wd1'], 3, 1, [(1, 1), (0, 0)]), p['d1_s'], p['d1_b'])
    br2 = bn_act(dw(t, p['wd2'], 3, 1, [(1, 1), (0, 0)]), p['d2_s'], p['d2_b'])
    br2 = bn_act(dw(br2, p['wd3'], 1, 3, [(0, 0), (1, 1)], dt=conv_dt),
                 p['d3_s'], p['d3_b'])
    br1 = eca(br1, p['eca1'])
    br2 = eca(br2, p['eca2'])
    s = bn_act(br1 + br2, p['bn2_s'], p['bn2_b'])
    out = conv3x3(s, p['w2'])
    return out + x_nhwc


# ----------------------------------------------------------------------------- main
if __name__ == "__main__":
    key = jax.random.PRNGKey(0)
    k_x, k_p = jax.random.split(key)

    B, nIn, H, W = 2, 16, 16, 16
    x = jax.random.normal(k_x, (B, nIn, H, W), jnp.float32)
    params = init_params(nIn, k_p)

    out = jax.block_until_ready(afc_forward(x, params))
    assert out.shape == (B, nIn, H, W)

    x_nhwc = jnp.transpose(x, (0, 2, 3, 1))
    ref_match = jnp.transpose(afc_reference(x_nhwc, params, exact=False), (0, 3, 1, 2))
    ref_exact = jnp.transpose(afc_reference(x_nhwc, params, exact=True), (0, 3, 1, 2))

    # 1) kernel vs numerics-matched reference (tight): validates layout/band plumbing.
    err_kernel = float(jnp.max(jnp.abs(out - ref_match)))
    # 2) approximation choices (tanh GELU + bf16 MXU operands) vs exact PyTorch-style
    #    semantics (erf GELU, f32 convs/ECA): loose bound.
    err_approx = float(jnp.max(jnp.abs(ref_match - ref_exact)))

    ok = (bool(jnp.isfinite(out).all()) and err_kernel < 5e-3 and err_approx < 5e-2)
    if not ok:
        raise SystemExit(f"mismatch: kernel={err_kernel} approx={err_approx}")
    print("KERNEL_OK")
</pallas_src>

<mosaic_0001>
module attributes {stable_mosaic.version = 11 : i64} {
  func.func @afc_kernel(%arg0: i32, %arg1: memref<1x18x256xf32, #tpu.memory_space<vmem>>, %arg2: memref<18x1xf32, #tpu.memory_space<vmem>>, %arg3: memref<1x256xf32, #tpu.memory_space<vmem>>, %arg4: memref<1x256xf32, #tpu.memory_space<vmem>>, %arg5: memref<3x256x128xbf16, #tpu.memory_space<vmem>>, %arg6: memref<1x128xf32, #tpu.memory_space<vmem>>, %arg7: memref<1x128xf32, #tpu.memory_space<vmem>>, %arg8: memref<3x128xf32, #tpu.memory_space<vmem>>, %arg9: memref<1x128xf32, #tpu.memory_space<vmem>>, %arg10: memref<1x128xf32, #tpu.memory_space<vmem>>, %arg11: memref<3x128xf32, #tpu.memory_space<vmem>>, %arg12: memref<1x128xf32, #tpu.memory_space<vmem>>, %arg13: memref<1x128xf32, #tpu.memory_space<vmem>>, %arg14: memref<128x128xbf16, #tpu.memory_space<vmem>>, %arg15: memref<1x128xf32, #tpu.memory_space<vmem>>, %arg16: memref<1x128xf32, #tpu.memory_space<vmem>>, %arg17: memref<256x256xbf16, #tpu.memory_space<vmem>>, %arg18: memref<1x16xbf16, #tpu.memory_space<vmem>>, %arg19: memref<16x1xbf16, #tpu.memory_space<vmem>>, %arg20: memref<1x128xf32, #tpu.memory_space<vmem>>, %arg21: memref<1x128xf32, #tpu.memory_space<vmem>>, %arg22: memref<3x128x256xbf16, #tpu.memory_space<vmem>>, %arg23: memref<1x18x256xf32, #tpu.memory_space<vmem>>, %arg24: memref<18x256xbf16, #tpu.memory_space<vmem>>, %arg25: memref<26x128xf32, #tpu.memory_space<vmem>>, %arg26: memref<26x128xbf16, #tpu.memory_space<vmem>>, %arg27: memref<16x256xbf16, #tpu.memory_space<vmem>>) attributes {dimension_semantics = [#tpu.dimension_semantics<parallel>], iteration_bounds = array<i64: 2>, scalar_prefetch = 0 : i64, scratch_operands = 4 : i64, tpu.core_type = #tpu.core_type<tc>, window_params = [{transform_indices = @transform_0, window_bounds = array<i64: 1, 18, 256>}, {pipeline_mode = #tpu.pipeline_mode<synchronous>, transform_indices = @transform_1, window_bounds = array<i64: 18, 1>}, {pipeline_mode = #tpu.pipeline_mode<synchronous>, transform_indices = @transform_2, window_bounds = array<i64: 1, 256>}, {pipeline_mode = #tpu.pipeline_mode<synchronous>, transform_indices = @transform_3, window_bounds = array<i64: 1, 256>}, {pipeline_mode = #tpu.pipeline_mode<synchronous>, transform_indices = @transform_4, window_bounds = array<i64: 3, 256, 128>}, {pipeline_mode = #tpu.pipeline_mode<synchronous>, transform_indices = @transform_5, window_bounds = array<i64: 1, 128>}, {pipeline_mode = #tpu.pipeline_mode<synchronous>, transform_indices = @transform_6, window_bounds = array<i64: 1, 128>}, {pipeline_mode = #tpu.pipeline_mode<synchronous>, transform_indices = @transform_7, window_bounds = array<i64: 3, 128>}, {pipeline_mode = #tpu.pipeline_mode<synchronous>, transform_indices = @transform_8, window_bounds = array<i64: 1, 128>}, {pipeline_mode = #tpu.pipeline_mode<synchronous>, transform_indices = @transform_9, window_bounds = array<i64: 1, 128>}, {pipeline_mode = #tpu.pipeline_mode<synchronous>, transform_indices = @transform_10, window_bounds = array<i64: 3, 128>}, {pipeline_mode = #tpu.pipeline_mode<synchronous>, transform_indices = @transform_11, window_bounds = array<i64: 1, 128>}, {pipeline_mode = #tpu.pipeline_mode<synchronous>, transform_indices = @transform_12, window_bounds = array<i64: 1, 128>}, {pipeline_mode = #tpu.pipeline_mode<synchronous>, transform_indices = @transform_13, window_bounds = array<i64: 128, 128>}, {pipeline_mode = #tpu.pipeline_mode<synchronous>, transform_indices = @transform_14, window_bounds = array<i64: 1, 128>}, {pipeline_mode = #tpu.pipeline_mode<synchronous>, transform_indices = @transform_15, window_bounds = array<i64: 1, 128>}, {pipeline_mode = #tpu.pipeline_mode<synchronous>, transform_indices = @transform_16, window_bounds = array<i64: 256, 256>}, {pipeline_mode = #tpu.pipeline_mode<synchronous>, transform_indices = @transform_17, window_bounds = array<i64: 1, 16>}, {pipeline_mode = #tpu.pipeline_mode<synchronous>, transform_indices = @transform_18, window_bounds = array<i64: 16, 1>}, {pipeline_mode = #tpu.pipeline_mode<synchronous>, transform_indices = @transform_19, window_bounds = array<i64: 1, 128>}, {pipeline_mode = #tpu.pipeline_mode<synchronous>, transform_indices = @transform_20, window_bounds = array<i64: 1, 128>}, {pipeline_mode = #tpu.pipeline_mode<synchronous>, transform_indices = @transform_21, window_bounds = array<i64: 3, 128, 256>}, {transform_indices = @transform_22, window_bounds = array<i64: 1, 18, 256>}]} {
    %cst = arith.constant 0.000000e+00 : f32
    %0 = vector.broadcast %cst : f32 to vector<2x128xf32>
    %c6 = arith.constant 6 : index
    %c0 = arith.constant 0 : index
    %1 = vector.load %arg25[%c6, %c0] : memref<26x128xf32, #tpu.memory_space<vmem>>, vector<2x128xf32>
    tpu.vector_store %arg25[%c6, %c0], %0 {strides = array<i32>} : memref<26x128xf32, #tpu.memory_space<vmem>>, vector<2x128xf32>,
    %cst_0 = arith.constant 0.000000e+00 : f32
    %2 = vector.broadcast %cst_0 : f32 to vector<2x128xf32>
    %c24 = arith.constant 24 : index
    %c0_1 = arith.constant 0 : index
    %3 = vector.load %arg25[%c24, %c0_1] : memref<26x128xf32, #tpu.memory_space<vmem>>, vector<2x128xf32>
    tpu.vector_store %arg25[%c24, %c0_1], %2 {strides = array<i32>} : memref<26x128xf32, #tpu.memory_space<vmem>>, vector<2x128xf32>,
    %cst_2 = arith.constant 0.000000e+00 : bf16
    %4 = vector.broadcast %cst_2 : bf16 to vector<2x128xbf16>
    %c6_3 = arith.constant 6 : index
    %c0_4 = arith.constant 0 : index
    %5 = vector.load %arg26[%c6_3, %c0_4] : memref<26x128xbf16, #tpu.memory_space<vmem>>, vector<2x128xbf16>
    tpu.vector_store %arg26[%c6_3, %c0_4], %4 {strides = array<i32>} : memref<26x128xbf16, #tpu.memory_space<vmem>>, vector<2x128xbf16>,
    %cst_5 = arith.constant 0.000000e+00 : bf16
    %6 = vector.broadcast %cst_5 : bf16 to vector<2x128xbf16>
    %c24_6 = arith.constant 24 : index
    %c0_7 = arith.constant 0 : index
    %7 = vector.load %arg26[%c24_6, %c0_7] : memref<26x128xbf16, #tpu.memory_space<vmem>>, vector<2x128xbf16>
    tpu.vector_store %arg26[%c24_6, %c0_7], %6 {strides = array<i32>} : memref<26x128xbf16, #tpu.memory_space<vmem>>, vector<2x128xbf16>,
    %c0_8 = arith.constant 0 : index
    %c0_9 = arith.constant 0 : index
    %8 = vector.load %arg2[%c0_8, %c0_9] : memref<18x1xf32, #tpu.memory_space<vmem>>, vector<18x1xf32>
    %c1 = arith.constant 1 : index
    %c0_10 = arith.constant 0 : index
    %9 = vector.load %arg2[%c1, %c0_10] : memref<18x1xf32, #tpu.memory_space<vmem>>, vector<16x1xf32>
    %c0_11 = arith.constant 0 : index
    %c0_12 = arith.constant 0 : index
    %c0_13 = arith.constant 0 : index
    %10 = vector.load %arg1[%c0_11, %c0_12, %c0_13] : memref<1x18x256xf32, #tpu.memory_space<vmem>>, vector<1x18x256xf32>
    %11 = vector.shape_cast %10 : vector<1x18x256xf32> to vector<18x256xf32>
    %c0_14 = arith.constant 0 : index
    %c0_15 = arith.constant 0 : index
    %12 = vector.load %arg3[%c0_14, %c0_15] : memref<1x256xf32, #tpu.memory_space<vmem>>, vector<1x256xf32>
    %13 = vector.broadcast %12 : vector<1x256xf32> to vector<18x256xf32>
    %14 = arith.mulf %11, %13 : vector<18x256xf32>
    %c0_16 = arith.constant 0 : index
    %c0_17 = arith.constant 0 : index
    %15 = vector.load %arg4[%c0_16, %c0_17] : memref<1x256xf32, #tpu.memory_space<vmem>>, vector<1x256xf32>
    %16 = vector.broadcast %15 : vector<1x256xf32> to vector<18x256xf32>
    %17 = arith.addf %14, %16 : vector<18x256xf32>
    %cst_18 = arith.constant 5.000000e-01 : f32
    %18 = vector.broadcast %cst_18 : f32 to vector<18x256xf32>
    %19 = arith.mulf %18, %17 : vector<18x256xf32>
    %cst_19 = arith.constant 4.471500e-02 : f32
    %20 = vector.broadcast %cst_19 : f32 to vector<18x256xf32>
    %21 = arith.mulf %20, %17 : vector<18x256xf32>
    %22 = arith.mulf %21, %17 : vector<18x256xf32>
    %23 = arith.mulf %22, %17 : vector<18x256xf32>
    %24 = arith.addf %17, %23 : vector<18x256xf32>
    %cst_20 = arith.constant 0.797884583 : f32
    %25 = vector.broadcast %cst_20 : f32 to vector<18x256xf32>
    %26 = arith.mulf %25, %24 : vector<18x256xf32>
    %27 = math.tanh %26 : vector<18x256xf32>
    %cst_21 = arith.constant 1.000000e+00 : f32
    %28 = vector.broadcast %cst_21 : f32 to vector<18x256xf32>
    %29 = arith.addf %28, %27 : vector<18x256xf32>
    %30 = arith.mulf %19, %29 : vector<18x256xf32>
    %31 = vector.broadcast %8 : vector<18x1xf32> to vector<18x256xf32>
    %32 = arith.mulf %30, %31 : vector<18x256xf32>
    %33 = arith.truncf %32 : vector<18x256xf32> to vector<18x256xbf16>
    %c0_22 = arith.constant 0 : index
    %c0_23 = arith.constant 0 : index
    %34 = vector.load %arg24[%c0_22, %c0_23] : memref<18x256xbf16, #tpu.memory_space<vmem>>, vector<18x256xbf16>
    tpu.vector_store %arg24[%c0_22, %c0_23], %33 {strides = array<i32>} : memref<18x256xbf16, #tpu.memory_space<vmem>>, vector<18x256xbf16>,
    %c0_24 = arith.constant 0 : index
    %c0_25 = arith.constant 0 : index
    %35 = vector.load %arg24[%c0_24, %c0_25] : memref<18x256xbf16, #tpu.memory_space<vmem>>, vector<16x256xbf16>
    %c0_26 = arith.constant 0 : index
    %c0_27 = arith.constant 0 : index
    %c0_28 = arith.constant 0 : index
    %36 = vector.load %arg5[%c0_26, %c0_27, %c0_28] : memref<3x256x128xbf16, #tpu.memory_space<vmem>>, vector<1x256x128xbf16>
    %37 = vector.shape_cast %36 : vector<1x256x128xbf16> to vector<256x128xbf16>
    %cst_29 = arith.constant dense<0.000000e+00> : vector<16x128xf32>
    %38 = tpu.matmul %35, %37, %cst_29 {dimension_numbers = #tpu.dot_dimension_numbers<[1], [0], [0], [1], [0, 0, 1, 1], [], []>} : vector<16x256xbf16>, vector<256x128xbf16>, vector<16x128xf32> -> vector<16x128xf32>
    %c1_30 = arith.constant 1 : index
    %c0_31 = arith.constant 0 : index
    %39 = vector.load %arg24[%c1_30, %c0_31] : memref<18x256xbf16, #tpu.memory_space<vmem>>, vector<16x256xbf16>
    %c1_32 = arith.constant 1 : index
    %c0_33 = arith.constant 0 : index
    %c0_34 = arith.constant 0 : index
    %40 = vector.load %arg5[%c1_32, %c0_33, %c0_34] : memref<3x256x128xbf16, #tpu.memory_space<vmem>>, vector<1x256x128xbf16>
    %41 = vector.shape_cast %40 : vector<1x256x128xbf16> to vector<256x128xbf16>
    %cst_35 = arith.constant dense<0.000000e+00> : vector<16x128xf32>
    %42 = tpu.matmul %39, %41, %cst_35 {dimension_numbers = #tpu.dot_dimension_numbers<[1], [0], [0], [1], [0, 0, 1, 1], [], []>} : vector<16x256xbf16>, vector<256x128xbf16>, vector<16x128xf32> -> vector<16x128xf32>
    %43 = arith.addf %38, %42 : vector<16x128xf32>
    %c2 = arith.constant 2 : index
    %c0_36 = arith.constant 0 : index
    %44 = vector.load %arg24[%c2, %c0_36] : memref<18x256xbf16, #tpu.memory_space<vmem>>, vector<16x256xbf16>
    %c2_37 = arith.constant 2 : index
    %c0_38 = arith.constant 0 : index
    %c0_39 = arith.constant 0 : index
    %45 = vector.load %arg5[%c2_37, %c0_38, %c0_39] : memref<3x256x128xbf16, #tpu.memory_space<vmem>>, vector<1x256x128xbf16>
    %46 = vector.shape_cast %45 : vector<1x256x128xbf16> to vector<256x128xbf16>
    %cst_40 = arith.constant dense<0.000000e+00> : vector<16x128xf32>
    %47 = tpu.matmul %44, %46, %cst_40 {dimension_numbers = #tpu.dot_dimension_numbers<[1], [0], [0], [1], [0, 0, 1, 1], [], []>} : vector<16x256xbf16>, vector<256x128xbf16>, vector<16x128xf32> -> vector<16x128xf32>
    %48 = arith.addf %43, %47 : vector<16x128xf32>
    %c0_41 = arith.constant 0 : index
    %c0_42 = arith.constant 0 : index
    %49 = vector.load %arg6[%c0_41, %c0_42] : memref<1x128xf32, #tpu.memory_space<vmem>>, vector<1x128xf32>
    %50 = vector.broadcast %49 : vector<1x128xf32> to vector<16x128xf32>
    %51 = arith.mulf %48, %50 : vector<16x128xf32>
    %c0_43 = arith.constant 0 : index
    %c0_44 = arith.constant 0 : index
    %52 = vector.load %arg7[%c0_43, %c0_44] : memref<1x128xf32, #tpu.memory_space<vmem>>, vector<1x128xf32>
    %53 = vector.broadcast %52 : vector<1x128xf32> to vector<16x128xf32>
    %54 = arith.addf %51, %53 : vector<16x128xf32>
    %cst_45 = arith.constant 5.000000e-01 : f32
    %55 = vector.broadcast %cst_45 : f32 to vector<16x128xf32>
    %56 = arith.mulf %55, %54 : vector<16x128xf32>
    %cst_46 = arith.constant 4.471500e-02 : f32
    %57 = vector.broadcast %cst_46 : f32 to vector<16x128xf32>
    %58 = arith.mulf %57, %54 : vector<16x128xf32>
    %59 = arith.mulf %58, %54 : vector<16x128xf32>
    %60 = arith.mulf %59, %54 : vector<16x128xf32>
    %61 = arith.addf %54, %60 : vector<16x128xf32>
    %cst_47 = arith.constant 0.797884583 : f32
    %62 = vector.broadcast %cst_47 : f32 to vector<16x128xf32>
    %63 = arith.mulf %62, %61 : vector<16x128xf32>
    %64 = math.tanh %63 : vector<16x128xf32>
    %cst_48 = arith.constant 1.000000e+00 : f32
    %65 = vector.broadcast %cst_48 : f32 to vector<16x128xf32>
    %66 = arith.addf %65, %64 : vector<16x128xf32>
    %67 = arith.mulf %56, %66 : vector<16x128xf32>
    %68 = vector.broadcast %9 : vector<16x1xf32> to vector<16x128xf32>
    %69 = arith.mulf %67, %68 : vector<16x128xf32>
    %c8 = arith.constant 8 : index
    %c0_49 = arith.constant 0 : index
    %70 = vector.load %arg25[%c8, %c0_49] : memref<26x128xf32, #tpu.memory_space<vmem>>, vector<16x128xf32>
    tpu.vector_store %arg25[%c8, %c0_49], %69 {strides = array<i32>} : memref<26x128xf32, #tpu.memory_space<vmem>>, vector<16x128xf32>,
    %c7 = arith.constant 7 : index
    %c0_50 = arith.constant 0 : index
    %71 = vector.load %arg25[%c7, %c0_50] : memref<26x128xf32, #tpu.memory_space<vmem>>, vector<16x128xf32>
    %c8_51 = arith.constant 8 : index
    %c0_52 = arith.constant 0 : index
    %72 = vector.load %arg25[%c8_51, %c0_52] : memref<26x128xf32, #tpu.memory_space<vmem>>, vector<16x128xf32>
    %c9 = arith.constant 9 : index
    %c0_53 = arith.constant 0 : index
    %73 = vector.load %arg25[%c9, %c0_53] : memref<26x128xf32, #tpu.memory_space<vmem>>, vector<16x128xf32>
    %c0_54 = arith.constant 0 : index
    %c0_55 = arith.constant 0 : index
    %74 = vector.load %arg8[%c0_54, %c0_55] : memref<3x128xf32, #tpu.memory_space<vmem>>, vector<1x128xf32>
    %75 = vector.broadcast %74 : vector<1x128xf32> to vector<16x128xf32>
    %76 = arith.mulf %71, %75 : vector<16x128xf32>
    %c1_56 = arith.constant 1 : index
    %c0_57 = arith.constant 0 : index
    %77 = vector.load %arg8[%c1_56, %c0_57] : memref<3x128xf32, #tpu.memory_space<vmem>>, vector<1x128xf32>
    %78 = vector.broadcast %77 : vector<1x128xf32> to vector<16x128xf32>
    %79 = arith.mulf %72, %78 : vector<16x128xf32>
    %80 = arith.addf %76, %79 : vector<16x128xf32>
    %c2_58 = arith.constant 2 : index
    %c0_59 = arith.constant 0 : index
    %81 = vector.load %arg8[%c2_58, %c0_59] : memref<3x128xf32, #tpu.memory_space<vmem>>, vector<1x128xf32>
    %82 = vector.broadcast %81 : vector<1x128xf32> to vector<16x128xf32>
    %83 = arith.mulf %73, %82 : vector<16x128xf32>
    %84 = arith.addf %80, %83 : vector<16x128xf32>
    %c0_60 = arith.constant 0 : index
    %c0_61 = arith.constant 0 : index
    %85 = vector.load %arg9[%c0_60, %c0_61] : memref<1x128xf32, #tpu.memory_space<vmem>>, vector<1x128xf32>
    %86 = vector.broadcast %85 : vector<1x128xf32> to vector<16x128xf32>
    %87 = arith.mulf %84, %86 : vector<16x128xf32>
    %c0_62 = arith.constant 0 : index
    %c0_63 = arith.constant 0 : index
    %88 = vector.load %arg10[%c0_62, %c0_63] : memref<1x128xf32, #tpu.memory_space<vmem>>, vector<1x128xf32>
    %89 = vector.broadcast %88 : vector<1x128xf32> to vector<16x128xf32>
    %90 = arith.addf %87, %89 : vector<16x128xf32>
    %cst_64 = arith.constant 5.000000e-01 : f32
    %91 = vector.broadcast %cst_64 : f32 to vector<16x128xf32>
    %92 = arith.mulf %91, %90 : vector<16x128xf32>
    %cst_65 = arith.constant 4.471500e-02 : f32
    %93 = vector.broadcast %cst_65 : f32 to vector<16x128xf32>
    %94 = arith.mulf %93, %90 : vector<16x128xf32>
    %95 = arith.mulf %94, %90 : vector<16x128xf32>
    %96 = arith.mulf %95, %90 : vector<16x128xf32>
    %97 = arith.addf %90, %96 : vector<16x128xf32>
    %cst_66 = arith.constant 0.797884583 : f32
    %98 = vector.broadcast %cst_66 : f32 to vector<16x128xf32>
    %99 = arith.mulf %98, %97 : vector<16x128xf32>
    %100 = math.tanh %99 : vector<16x128xf32>
    %cst_67 = arith.constant 1.000000e+00 : f32
    %101 = vector.broadcast %cst_67 : f32 to vector<16x128xf32>
    %102 = arith.addf %101, %100 : vector<16x128xf32>
    %103 = arith.mulf %92, %102 : vector<16x128xf32>
    %c0_68 = arith.constant 0 : index
    %c0_69 = arith.constant 0 : index
    %104 = vector.load %arg11[%c0_68, %c0_69] : memref<3x128xf32, #tpu.memory_space<vmem>>, vector<1x128xf32>
    %105 = vector.broadcast %104 : vector<1x128xf32> to vector<16x128xf32>
    %106 = arith.mulf %71, %105 : vector<16x128xf32>
    %c1_70 = arith.constant 1 : index
    %c0_71 = arith.constant 0 : index
    %107 = vector.load %arg11[%c1_70, %c0_71] : memref<3x128xf32, #tpu.memory_space<vmem>>, vector<1x128xf32>
    %108 = vector.broadcast %107 : vector<1x128xf32> to vector<16x128xf32>
    %109 = arith.mulf %72, %108 : vector<16x128xf32>
    %110 = arith.addf %106, %109 : vector<16x128xf32>
    %c2_72 = arith.constant 2 : index
    %c0_73 = arith.constant 0 : index
    %111 = vector.load %arg11[%c2_72, %c0_73] : memref<3x128xf32, #tpu.memory_space<vmem>>, vector<1x128xf32>
    %112 = vector.broadcast %111 : vector<1x128xf32> to vector<16x128xf32>
    %113 = arith.mulf %73, %112 : vector<16x128xf32>
    %114 = arith.addf %110, %113 : vector<16x128xf32>
    %c0_74 = arith.constant 0 : index
    %c0_75 = arith.constant 0 : index
    %115 = vector.load %arg12[%c0_74, %c0_75] : memref<1x128xf32, #tpu.memory_space<vmem>>, vector<1x128xf32>
    %116 = vector.broadcast %115 : vector<1x128xf32> to vector<16x128xf32>
    %117 = arith.mulf %114, %116 : vector<16x128xf32>
    %c0_76 = arith.constant 0 : index
    %c0_77 = arith.constant 0 : index
    %118 = vector.load %arg13[%c0_76, %c0_77] : memref<1x128xf32, #tpu.memory_space<vmem>>, vector<1x128xf32>
    %119 = vector.broadcast %118 : vector<1x128xf32> to vector<16x128xf32>
    %120 = arith.addf %117, %119 : vector<16x128xf32>
    %cst_78 = arith.constant 5.000000e-01 : f32
    %121 = vector.broadcast %cst_78 : f32 to vector<16x128xf32>
    %122 = arith.mulf %121, %120 : vector<16x128xf32>
    %cst_79 = arith.constant 4.471500e-02 : f32
    %123 = vector.broadcast %cst_79 : f32 to vector<16x128xf32>
    %124 = arith.mulf %123, %120 : vector<16x128xf32>
    %125 = arith.mulf %124, %120 : vector<16x128xf32>
    %126 = arith.mulf %125, %120 : vector<16x128xf32>
    %127 = arith.addf %120, %126 : vector<16x128xf32>
    %cst_80 = arith.constant 0.797884583 : f32
    %128 = vector.broadcast %cst_80 : f32 to vector<16x128xf32>
    %129 = arith.mulf %128, %127 : vector<16x128xf32>
    %130 = math.tanh %129 : vector<16x128xf32>
    %cst_81 = arith.constant 1.000000e+00 : f32
    %131 = vector.broadcast %cst_81 : f32 to vector<16x128xf32>
    %132 = arith.addf %131, %130 : vector<16x128xf32>
    %133 = arith.mulf %122, %132 : vector<16x128xf32>
    %134 = arith.truncf %133 : vector<16x128xf32> to vector<16x128xbf16>
    %c0_82 = arith.constant 0 : index
    %c0_83 = arith.constant 0 : index
    %135 = vector.load %arg14[%c0_82, %c0_83] : memref<128x128xbf16, #tpu.memory_space<vmem>>, vector<128x128xbf16>
    %cst_84 = arith.constant dense<0.000000e+00> : vector<16x128xf32>
    %136 = tpu.matmul %134, %135, %cst_84 {dimension_numbers = #tpu.dot_dimension_numbers<[1], [0], [0], [1], [0, 0, 1, 1], [], []>} : vector<16x128xbf16>, vector<128x128xbf16>, vector<16x128xf32> -> vector<16x128xf32>
    %c0_85 = arith.constant 0 : index
    %c0_86 = arith.constant 0 : index
    %137 = vector.load %arg15[%c0_85, %c0_86] : memref<1x128xf32, #tpu.memory_space<vmem>>, vector<1x128xf32>
    %138 = vector.broadcast %137 : vector<1x128xf32> to vector<16x128xf32>
    %139 = arith.mulf %136, %138 : vector<16x128xf32>
    %c0_87 = arith.constant 0 : index
    %c0_88 = arith.constant 0 : index
    %140 = vector.load %arg16[%c0_87, %c0_88] : memref<1x128xf32, #tpu.memory_space<vmem>>, vector<1x128xf32>
    %141 = vector.broadcast %140 : vector<1x128xf32> to vector<16x128xf32>
    %142 = arith.addf %139, %141 : vector<16x128xf32>
    %cst_89 = arith.constant 5.000000e-01 : f32
    %143 = vector.broadcast %cst_89 : f32 to vector<16x128xf32>
    %144 = arith.mulf %143, %142 : vector<16x128xf32>
    %cst_90 = arith.constant 4.471500e-02 : f32
    %145 = vector.broadcast %cst_90 : f32 to vector<16x128xf32>
    %146 = arith.mulf %145, %142 : vector<16x128xf32>
    %147 = arith.mulf %146, %142 : vector<16x128xf32>
    %148 = arith.mulf %147, %142 : vector<16x128xf32>
    %149 = arith.addf %142, %148 : vector<16x128xf32>
    %cst_91 = arith.constant 0.797884583 : f32
    %150 = vector.broadcast %cst_91 : f32 to vector<16x128xf32>
    %151 = arith.mulf %150, %149 : vector<16x128xf32>
    %152 = math.tanh %151 : vector<16x128xf32>
    %cst_92 = arith.constant 1.000000e+00 : f32
    %153 = vector.broadcast %cst_92 : f32 to vector<16x128xf32>
    %154 = arith.addf %153, %152 : vector<16x128xf32>
    %155 = arith.mulf %144, %154 : vector<16x128xf32>
    %156 = arith.truncf %103 : vector<16x128xf32> to vector<16x128xbf16>
    %c0_93 = arith.constant 0 : index
    %c0_94 = arith.constant 0 : index
    %157 = vector.load %arg27[%c0_93, %c0_94] : memref<16x256xbf16, #tpu.memory_space<vmem>>, vector<16x128xbf16>
    tpu.vector_store %arg27[%c0_93, %c0_94], %156 {strides = array<i32>} : memref<16x256xbf16, #tpu.memory_space<vmem>>, vector<16x128xbf16>,
    %158 = arith.truncf %155 : vector<16x128xf32> to vector<16x128xbf16>
    %c0_95 = arith.constant 0 : index
    %c128 = arith.constant 128 : index
    %159 = vector.load %arg27[%c0_95, %c128] : memref<16x256xbf16, #tpu.memory_space<vmem>>, vector<16x128xbf16>
    tpu.vector_store %arg27[%c0_95, %c128], %158 {strides = array<i32>} : memref<16x256xbf16, #tpu.memory_space<vmem>>, vector<16x128xbf16>,
    %c0_96 = arith.constant 0 : index
    %c0_97 = arith.constant 0 : index
    %160 = vector.load %arg18[%c0_96, %c0_97] : memref<1x16xbf16, #tpu.memory_space<vmem>>, vector<1x16xbf16>
    %c0_98 = arith.constant 0 : index
    %c0_99 = arith.constant 0 : index
    %161 = vector.load %arg27[%c0_98, %c0_99] : memref<16x256xbf16, #tpu.memory_space<vmem>>, vector<16x256xbf16>
    %cst_100 = arith.constant dense<0.000000e+00> : vector<1x256xf32>
    %162 = tpu.matmul %160, %161, %cst_100 {dimension_numbers = #tpu.dot_dimension_numbers<[1], [0], [0], [1], [0, 0, 1, 1], [], []>} : vector<1x16xbf16>, vector<16x256xbf16>, vector<1x256xf32> -> vector<1x256xf32>
    %163 = arith.truncf %162 : vector<1x256xf32> to vector<1x256xbf16>
    %c0_101 = arith.constant 0 : index
    %c0_102 = arith.constant 0 : index
    %164 = vector.load %arg17[%c0_101, %c0_102] : memref<256x256xbf16, #tpu.memory_space<vmem>>, vector<256x256xbf16>
    %cst_103 = arith.constant dense<0.000000e+00> : vector<1x256xf32>
    %165 = tpu.matmul %163, %164, %cst_103 {dimension_numbers = #tpu.dot_dimension_numbers<[1], [0], [0], [1], [0, 0, 1, 1], [], []>} : vector<1x256xbf16>, vector<256x256xbf16>, vector<1x256xf32> -> vector<1x256xf32>
    %cst_104 = arith.constant 0.000000e+00 : f32
    %166 = vector.broadcast %cst_104 : f32 to vector<1x256xf32>
    %167 = arith.subf %166, %165 : vector<1x256xf32>
    %168 = math.exp %167 : vector<1x256xf32>
    %cst_105 = arith.constant 1.000000e+00 : f32
    %169 = vector.broadcast %cst_105 : f32 to vector<1x256xf32>
    %170 = arith.addf %169, %168 : vector<1x256xf32>
    %cst_106 = arith.constant 1.000000e+00 : f32
    %171 = vector.broadcast %cst_106 : f32 to vector<1x256xf32>
    %172 = arith.divf %171, %170 : vector<1x256xf32>
    %173 = arith.truncf %172 : vector<1x256xf32> to vector<1x256xbf16>
    %174 = arith.extf %173 : vector<1x256xbf16> to vector<1x256xf32>
    %175 = vector.shape_cast %174 : vector<1x256xf32> to vector<1x256xf32>
    %176 = vector.broadcast %175 : vector<1x256xf32> to vector<16x256xf32>
    %177 = vector.extract_strided_slice %176 {offsets = [0, 0], sizes = [16, 128], strides = [1, 1]} : vector<16x256xf32> to vector<16x128xf32>
    %178 = arith.mulf %103, %177 : vector<16x128xf32>
    %179 = vector.extract_strided_slice %176 {offsets = [0, 128], sizes = [16, 128], strides = [1, 1]} : vector<16x256xf32> to vector<16x128xf32>
    %180 = arith.mulf %155, %179 : vector<16x128xf32>
    %181 = arith.addf %178, %180 : vector<16x128xf32>
    %c0_107 = arith.constant 0 : index
    %c0_108 = arith.constant 0 : index
    %182 = vector.load %arg20[%c0_107, %c0_108] : memref<1x128xf32, #tpu.memory_space<vmem>>, vector<1x128xf32>
    %183 = vector.broadcast %182 : vector<1x128xf32> to vector<16x128xf32>
    %184 = arith.mulf %181, %183 : vector<16x128xf32>
    %c0_109 = arith.constant 0 : index
    %c0_110 = arith.constant 0 : index
    %185 = vector.load %arg21[%c0_109, %c0_110] : memref<1x128xf32, #tpu.memory_space<vmem>>, vector<1x128xf32>
    %186 = vector.broadcast %185 : vector<1x128xf32> to vector<16x128xf32>
    %187 = arith.addf %184, %186 : vector<16x128xf32>
    %cst_111 = arith.constant 5.000000e-01 : f32
    %188 = vector.broadcast %cst_111 : f32 to vector<16x128xf32>
    %189 = arith.mulf %188, %187 : vector<16x128xf32>
    %cst_112 = arith.constant 4.471500e-02 : f32
    %190 = vector.broadcast %cst_112 : f32 to vector<16x128xf32>
    %191 = arith.mulf %190, %187 : vector<16x128xf32>
    %192 = arith.mulf %191, %187 : vector<16x128xf32>
    %193 = arith.mulf %192, %187 : vector<16x128xf32>
    %194 = arith.addf %187, %193 : vector<16x128xf32>
    %cst_113 = arith.constant 0.797884583 : f32
    %195 = vector.broadcast %cst_113 : f32 to vector<16x128xf32>
    %196 = arith.mulf %195, %194 : vector<16x128xf32>
    %197 = math.tanh %196 : vector<16x128xf32>
    %cst_114 = arith.constant 1.000000e+00 : f32
    %198 = vector.broadcast %cst_114 : f32 to vector<16x128xf32>
    %199 = arith.addf %198, %197 : vector<16x128xf32>
    %200 = arith.mulf %189, %199 : vector<16x128xf32>
    %201 = vector.broadcast %9 : vector<16x1xf32> to vector<16x128xf32>
    %202 = arith.mulf %200, %201 : vector<16x128xf32>
    %203 = arith.truncf %202 : vector<16x128xf32> to vector<16x128xbf16>
    %c8_115 = arith.constant 8 : index
    %c0_116 = arith.constant 0 : index
    %204 = vector.load %arg26[%c8_115, %c0_116] : memref<26x128xbf16, #tpu.memory_space<vmem>>, vector<16x128xbf16>
    tpu.vector_store %arg26[%c8_115, %c0_116], %203 {strides = array<i32>} : memref<26x128xbf16, #tpu.memory_space<vmem>>, vector<16x128xbf16>,
    %c7_117 = arith.constant 7 : index
    %c0_118 = arith.constant 0 : index
    %205 = vector.load %arg26[%c7_117, %c0_118] : memref<26x128xbf16, #tpu.memory_space<vmem>>, vector<16x128xbf16>
    %c0_119 = arith.constant 0 : index
    %c0_120 = arith.constant 0 : index
    %c0_121 = arith.constant 0 : index
    %206 = vector.load %arg22[%c0_119, %c0_120, %c0_121] : memref<3x128x256xbf16, #tpu.memory_space<vmem>>, vector<1x128x256xbf16>
    %207 = vector.shape_cast %206 : vector<1x128x256xbf16> to vector<128x256xbf16>
    %cst_122 = arith.constant dense<0.000000e+00> : vector<16x256xf32>
    %208 = tpu.matmul %205, %207, %cst_122 {dimension_numbers = #tpu.dot_dimension_numbers<[1], [0], [0], [1], [0, 0, 1, 1], [], []>} : vector<16x128xbf16>, vector<128x256xbf16>, vector<16x256xf32> -> vector<16x256xf32>
    %c8_123 = arith.constant 8 : index
    %c0_124 = arith.constant 0 : index
    %209 = vector.load %arg26[%c8_123, %c0_124] : memref<26x128xbf16, #tpu.memory_space<vmem>>, vector<16x128xbf16>
    %c1_125 = arith.constant 1 : index
    %c0_126 = arith.constant 0 : index
    %c0_127 = arith.constant 0 : index
    %210 = vector.load %arg22[%c1_125, %c0_126, %c0_127] : memref<3x128x256xbf16, #tpu.memory_space<vmem>>, vector<1x128x256xbf16>
    %211 = vector.shape_cast %210 : vector<1x128x256xbf16> to vector<128x256xbf16>
    %cst_128 = arith.constant dense<0.000000e+00> : vector<16x256xf32>
    %212 = tpu.matmul %209, %211, %cst_128 {dimension_numbers = #tpu.dot_dimension_numbers<[1], [0], [0], [1], [0, 0, 1, 1], [], []>} : vector<16x128xbf16>, vector<128x256xbf16>, vector<16x256xf32> -> vector<16x256xf32>
    %213 = arith.addf %208, %212 : vector<16x256xf32>
    %c9_129 = arith.constant 9 : index
    %c0_130 = arith.constant 0 : index
    %214 = vector.load %arg26[%c9_129, %c0_130] : memref<26x128xbf16, #tpu.memory_space<vmem>>, vector<16x128xbf16>
    %c2_131 = arith.constant 2 : index
    %c0_132 = arith.constant 0 : index
    %c0_133 = arith.constant 0 : index
    %215 = vector.load %arg22[%c2_131, %c0_132, %c0_133] : memref<3x128x256xbf16, #tpu.memory_space<vmem>>, vector<1x128x256xbf16>
    %216 = vector.shape_cast %215 : vector<1x128x256xbf16> to vector<128x256xbf16>
    %cst_134 = arith.constant dense<0.000000e+00> : vector<16x256xf32>
    %217 = tpu.matmul %214, %216, %cst_134 {dimension_numbers = #tpu.dot_dimension_numbers<[1], [0], [0], [1], [0, 0, 1, 1], [], []>} : vector<16x128xbf16>, vector<128x256xbf16>, vector<16x256xf32> -> vector<16x256xf32>
    %218 = arith.addf %213, %217 : vector<16x256xf32>
    %c0_135 = arith.constant 0 : index
    %c1_136 = arith.constant 1 : index
    %c0_137 = arith.constant 0 : index
    %219 = vector.load %arg1[%c0_135, %c1_136, %c0_137] : memref<1x18x256xf32, #tpu.memory_space<vmem>>, vector<1x16x256xf32>
    %220 = vector.shape_cast %219 : vector<1x16x256xf32> to vector<16x256xf32>
    %221 = arith.addf %218, %220 : vector<16x256xf32>
    %c0_138 = arith.constant 0 : index
    %c1_139 = arith.constant 1 : index
    %c0_140 = arith.constant 0 : index
    %222 = vector.load %arg23[%c0_138, %c1_139, %c0_140] : memref<1x18x256xf32, #tpu.memory_space<vmem>>, vector<1x16x256xf32>
    %223 = vector.shape_cast %222 : vector<1x16x256xf32> to vector<16x256xf32>
    %224 = vector.shape_cast %221 : vector<16x256xf32> to vector<1x16x256xf32>
    tpu.vector_store %arg23[%c0_138, %c1_139, %c0_140], %224 {strides = array<i32>} : memref<1x18x256xf32, #tpu.memory_space<vmem>>, vector<1x16x256xf32>,
    return
  }
  func.func @transform_0(%arg0: i32) -> (i32, i32, i32) {
    %c0_i32 = arith.constant 0 : i32
    %c0_i32_0 = arith.constant 0 : i32
    %c0_i32_1 = arith.constant 0 : i32
    return %arg0, %c0_i32, %c0_i32_0 : i32, i32, i32
  }
  func.func @transform_1(%arg0: i32) -> (i32, i32) {
    %c0_i32 = arith.constant 0 : i32
    %c0_i32_0 = arith.constant 0 : i32
    %c0_i32_1 = arith.constant 0 : i32
    return %c0_i32, %c0_i32_0 : i32, i32
  }
  func.func @transform_2(%arg0: i32) -> (i32, i32) {
    %c0_i32 = arith.constant 0 : i32
    %c0_i32_0 = arith.constant 0 : i32
    %c0_i32_1 = arith.constant 0 : i32
    return %c0_i32, %c0_i32_0 : i32, i32
  }
  func.func @transform_3(%arg0: i32) -> (i32, i32) {
    %c0_i32 = arith.constant 0 : i32
    %c0_i32_0 = arith.constant 0 : i32
    %c0_i32_1 = arith.constant 0 : i32
    return %c0_i32, %c0_i32_0 : i32, i32
  }
  func.func @transform_4(%arg0: i32) -> (i32, i32, i32) {
    %c0_i32 = arith.constant 0 : i32
    %c0_i32_0 = arith.constant 0 : i32
    %c0_i32_1 = arith.constant 0 : i32
    %c0_i32_2 = arith.constant 0 : i32
    return %c0_i32, %c0_i32_0, %c0_i32_1 : i32, i32, i32
  }
  func.func @transform_5(%arg0: i32) -> (i32, i32) {
    %c0_i32 = arith.constant 0 : i32
    %c0_i32_0 = arith.constant 0 : i32
    %c0_i32_1 = arith.constant 0 : i32
    return %c0_i32, %c0_i32_0 : i32, i32
  }
  func.func @transform_6(%arg0: i32) -> (i32, i32) {
    %c0_i32 = arith.constant 0 : i32
    %c0_i32_0 = arith.constant 0 : i32
    %c0_i32_1 = arith.constant 0 : i32
    return %c0_i32, %c0_i32_0 : i32, i32
  }
  func.func @transform_7(%arg0: i32) -> (i32, i32) {
    %c0_i32 = arith.constant 0 : i32
    %c0_i32_0 = arith.constant 0 : i32
    %c0_i32_1 = arith.constant 0 : i32
    return %c0_i32, %c0_i32_0 : i32, i32
  }
  func.func @transform_8(%arg0: i32) -> (i32, i32) {
    %c0_i32 = arith.constant 0 : i32
    %c0_i32_0 = arith.constant 0 : i32
    %c0_i32_1 = arith.constant 0 : i32
    return %c0_i32, %c0_i32_0 : i32, i32
  }
  func.func @transform_9(%arg0: i32) -> (i32, i32) {
    %c0_i32 = arith.constant 0 : i32
    %c0_i32_0 = arith.constant 0 : i32
    %c0_i32_1 = arith.constant 0 : i32
    return %c0_i32, %c0_i32_0 : i32, i32
  }
  func.func @transform_10(%arg0: i32) -> (i32, i32) {
    %c0_i32 = arith.constant 0 : i32
    %c0_i32_0 = arith.constant 0 : i32
    %c0_i32_1 = arith.constant 0 : i32
    return %c0_i32, %c0_i32_0 : i32, i32
  }
  func.func @transform_11(%arg0: i32) -> (i32, i32) {
    %c0_i32 = arith.constant 0 : i32
    %c0_i32_0 = arith.constant 0 : i32
    %c0_i32_1 = arith.constant 0 : i32
    return %c0_i32, %c0_i32_0 : i32, i32
  }
  func.func @transform_12(%arg0: i32) -> (i32, i32) {
    %c0_i32 = arith.constant 0 : i32
    %c0_i32_0 = arith.constant 0 : i32
    %c0_i32_1 = arith.constant 0 : i32
    return %c0_i32, %c0_i32_0 : i32, i32
  }
  func.func @transform_13(%arg0: i32) -> (i32, i32) {
    %c0_i32 = arith.constant 0 : i32
    %c0_i32_0 = arith.constant 0 : i32
    %c0_i32_1 = arith.constant 0 : i32
    return %c0_i32, %c0_i32_0 : i32, i32
  }
  func.func @transform_14(%arg0: i32) -> (i32, i32) {
    %c0_i32 = arith.constant 0 : i32
    %c0_i32_0 = arith.constant 0 : i32
    %c0_i32_1 = arith.constant 0 : i32
    return %c0_i32, %c0_i32_0 : i32, i32
  }
  func.func @transform_15(%arg0: i32) -> (i32, i32) {
    %c0_i32 = arith.constant 0 : i32
    %c0_i32_0 = arith.constant 0 : i32
    %c0_i32_1 = arith.constant 0 : i32
    return %c0_i32, %c0_i32_0 : i32, i32
  }
  func.func @transform_16(%arg0: i32) -> (i32, i32) {
    %c0_i32 = arith.constant 0 : i32
    %c0_i32_0 = arith.constant 0 : i32
    %c0_i32_1 = arith.constant 0 : i32
    return %c0_i32, %c0_i32_0 : i32, i32
  }
  func.func @transform_17(%arg0: i32) -> (i32, i32) {
    %c0_i32 = arith.constant 0 : i32
    %c0_i32_0 = arith.constant 0 : i32
    %c0_i32_1 = arith.constant 0 : i32
    return %c0_i32, %c0_i32_0 : i32, i32
  }
  func.func @transform_18(%arg0: i32) -> (i32, i32) {
    %c0_i32 = arith.constant 0 : i32
    %c0_i32_0 = arith.constant 0 : i32
    %c0_i32_1 = arith.constant 0 : i32
    return %c0_i32, %c0_i32_0 : i32, i32
  }
  func.func @transform_19(%arg0: i32) -> (i32, i32) {
    %c0_i32 = arith.constant 0 : i32
    %c0_i32_0 = arith.constant 0 : i32
    %c0_i32_1 = arith.constant 0 : i32
    return %c0_i32, %c0_i32_0 : i32, i32
  }
  func.func @transform_20(%arg0: i32) -> (i32, i32) {
    %c0_i32 = arith.constant 0 : i32
    %c0_i32_0 = arith.constant 0 : i32
    %c0_i32_1 = arith.constant 0 : i32
    return %c0_i32, %c0_i32_0 : i32, i32
  }
  func.func @transform_21(%arg0: i32) -> (i32, i32, i32) {
    %c0_i32 = arith.constant 0 : i32
    %c0_i32_0 = arith.constant 0 : i32
    %c0_i32_1 = arith.constant 0 : i32
    %c0_i32_2 = arith.constant 0 : i32
    return %c0_i32, %c0_i32_0, %c0_i32_1 : i32, i32, i32
  }
  func.func @transform_22(%arg0: i32) -> (i32, i32, i32) {
    %c0_i32 = arith.constant 0 : i32
    %c0_i32_0 = arith.constant 0 : i32
    %c0_i32_1 = arith.constant 0 : i32
    return %arg0, %c0_i32, %c0_i32_0 : i32, i32, i32
  }
}

</mosaic_0001>

<llo_original>
// kernel: tpu_custom_call.1
$region0: #{tpu_custom_call.1}
  #allocation0 [shape = 'u32[]', space=smem, size = 0x4, offset = 0x4, fixed_abs, tag = 'smem constant byte address 0x4 - core index']
  #allocation1 [shape = 'u32[72,128]{1,0:T(1,128)}', space=vmem, size = 0x9000, scoped, tag = 'internal scratch']
  #allocation2 [shape = 'bf16[18,256]{1,0:T(8,128)(2,1)}', space=vmem, size = 0x3000, scoped, tag = 'scratch operand']
  #allocation3 [shape = 'f32[26,128]{1,0:T(8,128)}', space=vmem, size = 0x4000, scoped, tag = 'scratch operand']
  #allocation4 [shape = 'bf16[26,128]{1,0:T(8,128)(2,1)}', space=vmem, size = 0x2000, scoped, tag = 'scratch operand']
  #allocation5 [shape = 'bf16[16,256]{1,0:T(8,128)(2,1)}', space=vmem, size = 0x2000, scoped, tag = 'scratch operand']
  %s0 = inlined_call_operand.vmem [shape: f32[2,18,256], index: 0, kind: input, shape index: {}]
  %s1 = inlined_call_operand.vmem [shape: f32[18,1], index: 1, kind: input, shape index: {}]
  %s2 = inlined_call_operand.vmem [shape: f32[1,256], index: 2, kind: input, shape index: {}]
  %s3 = inlined_call_operand.vmem [shape: f32[1,256], index: 3, kind: input, shape index: {}]
  %s4 = inlined_call_operand.hbm [shape: bf16[3,256,128], index: 4, kind: input, shape index: {}]
  %s5 = inlined_call_operand.vmem [shape: f32[1,128], index: 5, kind: input, shape index: {}]
  %s6 = inlined_call_operand.vmem [shape: f32[1,128], index: 6, kind: input, shape index: {}]
  %s7 = inlined_call_operand.vmem [shape: f32[3,128], index: 7, kind: input, shape index: {}]
  %s8 = inlined_call_operand.vmem [shape: f32[1,128], index: 8, kind: input, shape index: {}]
  %s9 = inlined_call_operand.vmem [shape: f32[1,128], index: 9, kind: input, shape index: {}]
  %s10 = inlined_call_operand.vmem [shape: f32[3,128], index: 10, kind: input, shape index: {}]
  %s11 = inlined_call_operand.vmem [shape: f32[1,128], index: 11, kind: input, shape index: {}]
  %s12 = inlined_call_operand.vmem [shape: f32[1,128], index: 12, kind: input, shape index: {}]
  %s13 = inlined_call_operand.vmem [shape: bf16[128,128], index: 13, kind: input, shape index: {}]
  %s14 = inlined_call_operand.vmem [shape: f32[1,128], index: 14, kind: input, shape index: {}]
  %s15 = inlined_call_operand.vmem [shape: f32[1,128], index: 15, kind: input, shape index: {}]
  %s16 = inlined_call_operand.hbm [shape: bf16[256,256], index: 16, kind: input, shape index: {}]
  %s17 = inlined_call_operand.vmem [shape: bf16[1,16], index: 17, kind: input, shape index: {}]
  %s18 = inlined_call_operand.vmem [shape: bf16[16,1], index: 18, kind: input, shape index: {}]
  %s19 = inlined_call_operand.vmem [shape: f32[1,128], index: 19, kind: input, shape index: {}]
  %s20 = inlined_call_operand.vmem [shape: f32[1,128], index: 20, kind: input, shape index: {}]
  %s21 = inlined_call_operand.hbm [shape: bf16[3,128,256], index: 21, kind: input, shape index: {}]
  %s22 = inlined_call_operand.vmem [shape: f32[2,18,256], index: 22, kind: output, shape index: {}]
  %s23 = sld [smem:[#allocation0]]
  $region133: #{tpu_custom_call.1} parent=0
    _
  %s25 = ssub.s32 1, %s23
  %s26 = scalar_select 0, %s25, %s23
  $region1: #{tpu_custom_call.1} parent=0
    #allocation6 [shape = 'u8[196608]{0}', space=vmem, size = 0x30000, scoped, tag = 'input window, operand 4, single buffered']
    #allocation7 [shape = 's32[2]{0}', space=sflag, size = 0x8, scoped, tag = 'scoped memory for tpu_custom_call.1']
    #allocation8 [shape = 'u8[131072]{0}', space=vmem, size = 0x20000, scoped, tag = 'input window, operand 16, single buffered']
    #allocation9 [shape = 's32[1]{0}', space=sflag, size = 0x4, scoped, tag = 'scoped memory for tpu_custom_call.1']
    #allocation10 [shape = 'u8[196608]{0}', space=vmem, size = 0x30000, scoped, tag = 'input window, operand 21, single buffered']
    %27 = vsyncpa [#allocation7], 0
    %28 = vsyncpa [#allocation9], 0
    loop: start=0, step=1, limit=4
    $region2: #{tpu_custom_call.1} parent=1 // loop_pre_header
      _
    $region3: #{tpu_custom_call.1} parent=1 // loop_header
      %s30 = sphi 0, %s34
      %p31 = scmp.ge.s32.totalorder %s30, 4
      %s40 = sphi 0, %s42
      %s43 = sphi 0, %s40
      %s44 = sphi 0, %s43
      %s60 = sphi 0, %s44
      %s64 = sphi 0, %s64
      %s66 = sphi 0, %s64
      %s67 = sphi 0, %s66
      %s81 = sphi 0, %s67
      %s85 = sphi 0, %s85
      %s87 = sphi 0, %s85
      %s88 = sphi 0, %s87
      %s102 = sphi 0, %s88
      %s106 = sphi 0, %s106
      %s108 = sphi 0, %s106
      %s109 = sphi 0, %s108
      %s123 = sphi 0, %s109
      %s127 = sphi 0, %s127
      %s129 = sphi 0, %s127
      %s130 = sphi 0, %s129
      %s144 = sphi 0, %s130
      %s148 = sphi 0, %s148
      %s150 = sphi 0, %s148
      %s151 = sphi 0, %s150
      %s165 = sphi 0, %s151
      %s169 = sphi 0, %s169
      %s171 = sphi 0, %s169
      %s172 = sphi 0, %s171
      %s186 = sphi 0, %s172
      %s190 = sphi 0, %s190
      %s192 = sphi 0, %s190
      %s193 = sphi 0, %s192
      %s207 = sphi 0, %s193
      %s211 = sphi 0, %s211
      %s213 = sphi 0, %s211
      %s214 = sphi 0, %s213
      %s228 = sphi 0, %s214
      %s232 = sphi 0, %s232
      %s234 = sphi 0, %s232
      %s235 = sphi 0, %s234
      %s249 = sphi 0, %s235
      %s253 = sphi 0, %s253
      %s255 = sphi 0, %s253
      %s256 = sphi 0, %s255
      %s270 = sphi 0, %s256
      %s274 = sphi 0, %s274
      %s276 = sphi 0, %s274
      %s277 = sphi 0, %s276
      %s291 = sphi 0, %s277
      %s295 = sphi 0, %s295
      %s297 = sphi 0, %s295
      %s298 = sphi 0, %s297
      %s312 = sphi 0, %s298
      %s316 = sphi 0, %s316
      %s318 = sphi 0, %s316
      %s319 = sphi 0, %s318
      %s333 = sphi 0, %s319
      %s337 = sphi 0, %s337
      %s339 = sphi 0, %s337
      %s340 = sphi 0, %s339
      %s354 = sphi 0, %s340
      %s358 = sphi 0, %s358
      %s360 = sphi 0, %s358
      %s361 = sphi 0, %s360
      %s375 = sphi 0, %s361
      %s379 = sphi 0, %s379
      %s381 = sphi 0, %s379
      %s382 = sphi 0, %s381
      %s396 = sphi 0, %s382
      %s400 = sphi 0, %s400
      %s402 = sphi 0, %s400
      %s403 = sphi 0, %s402
      %s417 = sphi 0, %s403
      %s421 = sphi 0, %s421
      %s423 = sphi 0, %s421
      %s424 = sphi 0, %s423
      %s438 = sphi 0, %s424
      %s442 = sphi 0, %s442
      %s444 = sphi 0, %s442
      %s445 = sphi 0, %s444
      %s459 = sphi 0, %s445
      %s463 = sphi 0, %s463
      %s465 = sphi 0, %s463
      %s466 = sphi 0, %s465
      %s480 = sphi 0, %s466
      %s484 = sphi 0, %s484
      %s486 = sphi 0, %s484
      %s487 = sphi 0, %s486
      %s501 = sphi 0, %s487
      %s507 = sphi 0, %s509
      %s510 = sphi 0, %s507
      %s511 = sphi 0, %s510
      %s527 = sphi 0, %s511
    $region4: #{tpu_custom_call.1} parent=1 // loop_header_branch
      %33 = sbr.rel (%p31) target = $region8
    $region5: #{tpu_custom_call.1} parent=1 // loop_body
      %s35 = ssub.s32 %s30, 1
      %s36 = ssub.s32 %s30, 2
      %s37 = sadd.s32 %s30, 1
      %s38 = ssub.s32 %s30, %s37
      %p39 = scmp.eq.s32.totalorder %s38, 0
      %s41 = sadd.s32 %s40, 1
      %s42 = scalar_select %p39, %s40, %s41
      %p45 = pneg %p39
      %p46 = scmp.eq.s32.totalorder %s30, 1
      %p47 = por %p45, %p46
      %p48 = scmp.ne.s32.totalorder %s40, %s43
      %p49 = scmp.eq.s32.totalorder %s30, 0
      %p50 = por %p48, %p49
      %p51 = scmp.ne.s32.totalorder %s40, %s43
      %p52 = scmp.eq.s32.totalorder %s35, 1
      %p53 = por %p51, %p52
      %p54 = scmp.ne.s32.totalorder %s43, %s44
      %p55 = scmp.eq.s32.totalorder %s35, 0
      %p56 = por %p54, %p55
      %p57 = scmp.ne.s32.totalorder %s43, %s44
      %p58 = scmp.eq.s32.totalorder %s36, 1
      %p59 = por %p57, %p58
      %p61 = scmp.ne.s32.totalorder %s44, %s60
      %p62 = scmp.eq.s32.totalorder %s36, 0
      %p63 = por %p61, %p62
      %s65 = sadd.s32 %s64, 1
      %p68 = scmp.eq.s32.totalorder %s30, 1
      %p69 = scmp.ne.s32.totalorder %s64, %s66
      %p70 = scmp.eq.s32.totalorder %s30, 0
      %p71 = por %p69, %p70
      %p72 = scmp.ne.s32.totalorder %s64, %s66
      %p73 = scmp.eq.s32.totalorder %s35, 1
      %p74 = por %p72, %p73
      %p75 = scmp.ne.s32.totalorder %s66, %s67
      %p76 = scmp.eq.s32.totalorder %s35, 0
      %p77 = por %p75, %p76
      %p78 = scmp.ne.s32.totalorder %s66, %s67
      %p79 = scmp.eq.s32.totalorder %s36, 1
      %p80 = por %p78, %p79
      %p82 = scmp.ne.s32.totalorder %s67, %s81
      %p83 = scmp.eq.s32.totalorder %s36, 0
      %p84 = por %p82, %p83
      %s86 = sadd.s32 %s85, 1
      %p89 = scmp.eq.s32.totalorder %s30, 1
      %p90 = scmp.ne.s32.totalorder %s85, %s87
      %p91 = scmp.eq.s32.totalorder %s30, 0
      %p92 = por %p90, %p91
      %p93 = scmp.ne.s32.totalorder %s85, %s87
      %p94 = scmp.eq.s32.totalorder %s35, 1
      %p95 = por %p93, %p94
      %p96 = scmp.ne.s32.totalorder %s87, %s88
      %p97 = scmp.eq.s32.totalorder %s35, 0
      %p98 = por %p96, %p97
      %p99 = scmp.ne.s32.totalorder %s87, %s88
      %p100 = scmp.eq.s32.totalorder %s36, 1
      %p101 = por %p99, %p100
      %p103 = scmp.ne.s32.totalorder %s88, %s102
      %p104 = scmp.eq.s32.totalorder %s36, 0
      %p105 = por %p103, %p104
      %s107 = sadd.s32 %s106, 1
      %p110 = scmp.eq.s32.totalorder %s30, 1
      %p111 = scmp.ne.s32.totalorder %s106, %s108
      %p112 = scmp.eq.s32.totalorder %s30, 0
      %p113 = por %p111, %p112
      %p114 = scmp.ne.s32.totalorder %s106, %s108
      %p115 = scmp.eq.s32.totalorder %s35, 1
      %p116 = por %p114, %p115
      %p117 = scmp.ne.s32.totalorder %s108, %s109
      %p118 = scmp.eq.s32.totalorder %s35, 0
      %p119 = por %p117, %p118
      %p120 = scmp.ne.s32.totalorder %s108, %s109
      %p121 = scmp.eq.s32.totalorder %s36, 1
      %p122 = por %p120, %p121
      %p124 = scmp.ne.s32.totalorder %s109, %s123
      %p125 = scmp.eq.s32.totalorder %s36, 0
      %p126 = por %p124, %p125
      %s128 = sadd.s32 %s127, 1
      %p131 = scmp.eq.s32.totalorder %s30, 1
      %p132 = scmp.ne.s32.totalorder %s127, %s129
      %p133 = scmp.eq.s32.totalorder %s30, 0
      %p134 = por %p132, %p133
      %p135 = scmp.ne.s32.totalorder %s127, %s129
      %p136 = scmp.eq.s32.totalorder %s35, 1
      %p137 = por %p135, %p136
      %p138 = scmp.ne.s32.totalorder %s129, %s130
      %p139 = scmp.eq.s32.totalorder %s35, 0
      %p140 = por %p138, %p139
      %p141 = scmp.ne.s32.totalorder %s129, %s130
      %p142 = scmp.eq.s32.totalorder %s36, 1
      %p143 = por %p141, %p142
      %p145 = scmp.ne.s32.totalorder %s130, %s144
      %p146 = scmp.eq.s32.totalorder %s36, 0
      %p147 = por %p145, %p146
      %s149 = sadd.s32 %s148, 1
      %p152 = scmp.eq.s32.totalorder %s30, 1
      %p153 = scmp.ne.s32.totalorder %s148, %s150
      %p154 = scmp.eq.s32.totalorder %s30, 0
      %p155 = por %p153, %p154
      %p156 = scmp.ne.s32.totalorder %s148, %s150
      %p157 = scmp.eq.s32.totalorder %s35, 1
      %p158 = por %p156, %p157
      %p159 = scmp.ne.s32.totalorder %s150, %s151
      %p160 = scmp.eq.s32.totalorder %s35, 0
      %p161 = por %p159, %p160
      %p162 = scmp.ne.s32.totalorder %s150, %s151
      %p163 = scmp.eq.s32.totalorder %s36, 1
      %p164 = por %p162, %p163
      %p166 = scmp.ne.s32.totalorder %s151, %s165
      %p167 = scmp.eq.s32.totalorder %s36, 0
      %p168 = por %p166, %p167
      %s170 = sadd.s32 %s169, 1
      %p173 = scmp.eq.s32.totalorder %s30, 1
      %p174 = scmp.ne.s32.totalorder %s169, %s171
      %p175 = scmp.eq.s32.totalorder %s30, 0
      %p176 = por %p174, %p175
      %p177 = scmp.ne.s32.totalorder %s169, %s171
      %p178 = scmp.eq.s32.totalorder %s35, 1
      %p179 = por %p177, %p178
      %p180 = scmp.ne.s32.totalorder %s171, %s172
      %p181 = scmp.eq.s32.totalorder %s35, 0
      %p182 = por %p180, %p181
      %p183 = scmp.ne.s32.totalorder %s171, %s172
      %p184 = scmp.eq.s32.totalorder %s36, 1
      %p185 = por %p183, %p184
      %p187 = scmp.ne.s32.totalorder %s172, %s186
      %p188 = scmp.eq.s32.totalorder %s36, 0
      %p189 = por %p187, %p188
      %s191 = sadd.s32 %s190, 1
      %p194 = scmp.eq.s32.totalorder %s30, 1
      %p195 = scmp.ne.s32.totalorder %s190, %s192
      %p196 = scmp.eq.s32.totalorder %s30, 0
      %p197 = por %p195, %p196
      %p198 = scmp.ne.s32.totalorder %s190, %s192
      %p199 = scmp.eq.s32.totalorder %s35, 1
      %p200 = por %p198, %p199
      %p201 = scmp.ne.s32.totalorder %s192, %s193
      %p202 = scmp.eq.s32.totalorder %s35, 0
      %p203 = por %p201, %p202
      %p204 = scmp.ne.s32.totalorder %s192, %s193
      %p205 = scmp.eq.s32.totalorder %s36, 1
      %p206 = por %p204, %p205
      %p208 = scmp.ne.s32.totalorder %s193, %s207
      %p209 = scmp.eq.s32.totalorder %s36, 0
      %p210 = por %p208, %p209
      %s212 = sadd.s32 %s211, 1
      %p215 = scmp.eq.s32.totalorder %s30, 1
      %p216 = scmp.ne.s32.totalorder %s211, %s213
      %p217 = scmp.eq.s32.totalorder %s30, 0
      %p218 = por %p216, %p217
      %p219 = scmp.ne.s32.totalorder %s211, %s213
      %p220 = scmp.eq.s32.totalorder %s35, 1
      %p221 = por %p219, %p220
      %p222 = scmp.ne.s32.totalorder %s213, %s214
      %p223 = scmp.eq.s32.totalorder %s35, 0
      %p224 = por %p222, %p223
      %p225 = scmp.ne.s32.totalorder %s213, %s214
      %p226 = scmp.eq.s32.totalorder %s36, 1
      %p227 = por %p225, %p226
      %p229 = scmp.ne.s32.totalorder %s214, %s228
      %p230 = scmp.eq.s32.totalorder %s36, 0
      %p231 = por %p229, %p230
      %s233 = sadd.s32 %s232, 1
      %p236 = scmp.eq.s32.totalorder %s30, 1
      %p237 = scmp.ne.s32.totalorder %s232, %s234
      %p238 = scmp.eq.s32.totalorder %s30, 0
      %p239 = por %p237, %p238
      %p240 = scmp.ne.s32.totalorder %s232, %s234
      %p241 = scmp.eq.s32.totalorder %s35, 1
      %p242 = por %p240, %p241
      %p243 = scmp.ne.s32.totalorder %s234, %s235
      %p244 = scmp.eq.s32.totalorder %s35, 0
      %p245 = por %p243, %p244
      %p246 = scmp.ne.s32.totalorder %s234, %s235
      %p247 = scmp.eq.s32.totalorder %s36, 1
      %p248 = por %p246, %p247
      %p250 = scmp.ne.s32.totalorder %s235, %s249
      %p251 = scmp.eq.s32.totalorder %s36, 0
      %p252 = por %p250, %p251
      %s254 = sadd.s32 %s253, 1
      %p257 = scmp.eq.s32.totalorder %s30, 1
      %p258 = scmp.ne.s32.totalorder %s253, %s255
      %p259 = scmp.eq.s32.totalorder %s30, 0
      %p260 = por %p258, %p259
      %p261 = scmp.ne.s32.totalorder %s253, %s255
      %p262 = scmp.eq.s32.totalorder %s35, 1
      %p263 = por %p261, %p262
      %p264 = scmp.ne.s32.totalorder %s255, %s256
      %p265 = scmp.eq.s32.totalorder %s35, 0
      %p266 = por %p264, %p265
      %p267 = scmp.ne.s32.totalorder %s255, %s256
      %p268 = scmp.eq.s32.totalorder %s36, 1
      %p269 = por %p267, %p268
      %p271 = scmp.ne.s32.totalorder %s256, %s270
      %p272 = scmp.eq.s32.totalorder %s36, 0
      %p273 = por %p271, %p272
      %s275 = sadd.s32 %s274, 1
      %p278 = scmp.eq.s32.totalorder %s30, 1
      %p279 = scmp.ne.s32.totalorder %s274, %s276
      %p280 = scmp.eq.s32.totalorder %s30, 0
      %p281 = por %p279, %p280
      %p282 = scmp.ne.s32.totalorder %s274, %s276
      %p283 = scmp.eq.s32.totalorder %s35, 1
      %p284 = por %p282, %p283
      %p285 = scmp.ne.s32.totalorder %s276, %s277
      %p286 = scmp.eq.s32.totalorder %s35, 0
      %p287 = por %p285, %p286
      %p288 = scmp.ne.s32.totalorder %s276, %s277
      %p289 = scmp.eq.s32.totalorder %s36, 1
      %p290 = por %p288, %p289
      %p292 = scmp.ne.s32.totalorder %s277, %s291
      %p293 = scmp.eq.s32.totalorder %s36, 0
      %p294 = por %p292, %p293
      %s296 = sadd.s32 %s295, 1
      %p299 = scmp.eq.s32.totalorder %s30, 1
      %p300 = scmp.ne.s32.totalorder %s295, %s297
      %p301 = scmp.eq.s32.totalorder %s30, 0
      %p302 = por %p300, %p301
      %p303 = scmp.ne.s32.totalorder %s295, %s297
      %p304 = scmp.eq.s32.totalorder %s35, 1
      %p305 = por %p303, %p304
      %p306 = scmp.ne.s32.totalorder %s297, %s298
      %p307 = scmp.eq.s32.totalorder %s35, 0
      %p308 = por %p306, %p307
      %p309 = scmp.ne.s32.totalorder %s297, %s298
      %p310 = scmp.eq.s32.totalorder %s36, 1
      %p311 = por %p309, %p310
      %p313 = scmp.ne.s32.totalorder %s298, %s312
      %p314 = scmp.eq.s32.totalorder %s36, 0
      %p315 = por %p313, %p314
      %s317 = sadd.s32 %s316, 1
      %p320 = scmp.eq.s32.totalorder %s30, 1
      %p321 = scmp.ne.s32.totalorder %s316, %s318
      %p322 = scmp.eq.s32.totalorder %s30, 0
      %p323 = por %p321, %p322
      %p324 = scmp.ne.s32.totalorder %s316, %s318
      %p325 = scmp.eq.s32.totalorder %s35, 1
      %p326 = por %p324, %p325
      %p327 = scmp.ne.s32.totalorder %s318, %s319
      %p328 = scmp.eq.s32.totalorder %s35, 0
      %p329 = por %p327, %p328
      %p330 = scmp.ne.s32.totalorder %s318, %s319
      %p331 = scmp.eq.s32.totalorder %s36, 1
      %p332 = por %p330, %p331
      %p334 = scmp.ne.s32.totalorder %s319, %s333
      %p335 = scmp.eq.s32.totalorder %s36, 0
      %p336 = por %p334, %p335
      %s338 = sadd.s32 %s337, 1
      %p341 = scmp.eq.s32.totalorder %s30, 1
      %p342 = scmp.ne.s32.totalorder %s337, %s339
      %p343 = scmp.eq.s32.totalorder %s30, 0
      %p344 = por %p342, %p343
      %p345 = scmp.ne.s32.totalorder %s337, %s339
      %p346 = scmp.eq.s32.totalorder %s35, 1
      %p347 = por %p345, %p346
      %p348 = scmp.ne.s32.totalorder %s339, %s340
      %p349 = scmp.eq.s32.totalorder %s35, 0
      %p350 = por %p348, %p349
      %p351 = scmp.ne.s32.totalorder %s339, %s340
      %p352 = scmp.eq.s32.totalorder %s36, 1
      %p353 = por %p351, %p352
      %p355 = scmp.ne.s32.totalorder %s340, %s354
      %p356 = scmp.eq.s32.totalorder %s36, 0
      %p357 = por %p355, %p356
      %s359 = sadd.s32 %s358, 1
      %p362 = scmp.eq.s32.totalorder %s30, 1
      %p363 = scmp.ne.s32.totalorder %s358, %s360
      %p364 = scmp.eq.s32.totalorder %s30, 0
      %p365 = por %p363, %p364
      %p366 = scmp.ne.s32.totalorder %s358, %s360
      %p367 = scmp.eq.s32.totalorder %s35, 1
      %p368 = por %p366, %p367
      %p369 = scmp.ne.s32.totalorder %s360, %s361
      %p370 = scmp.eq.s32.totalorder %s35, 0
      %p371 = por %p369, %p370
      %p372 = scmp.ne.s32.totalorder %s360, %s361
      %p373 = scmp.eq.s32.totalorder %s36, 1
      %p374 = por %p372, %p373
      %p376 = scmp.ne.s32.totalorder %s361, %s375
      %p377 = scmp.eq.s32.totalorder %s36, 0
      %p378 = por %p376, %p377
      %s380 = sadd.s32 %s379, 1
      %p383 = scmp.eq.s32.totalorder %s30, 1
      %p384 = scmp.ne.s32.totalorder %s379, %s381
      %p385 = scmp.eq.s32.totalorder %s30, 0
      %p386 = por %p384, %p385
      %p387 = scmp.ne.s32.totalorder %s379, %s381
      %p388 = scmp.eq.s32.totalorder %s35, 1
      %p389 = por %p387, %p388
      %p390 = scmp.ne.s32.totalorder %s381, %s382
      %p391 = scmp.eq.s32.totalorder %s35, 0
      %p392 = por %p390, %p391
      %p393 = scmp.ne.s32.totalorder %s381, %s382
      %p394 = scmp.eq.s32.totalorder %s36, 1
      %p395 = por %p393, %p394
      %p397 = scmp.ne.s32.totalorder %s382, %s396
      %p398 = scmp.eq.s32.totalorder %s36, 0
      %p399 = por %p397, %p398
      %s401 = sadd.s32 %s400, 1
      %p404 = scmp.eq.s32.totalorder %s30, 1
      %p405 = scmp.ne.s32.totalorder %s400, %s402
      %p406 = scmp.eq.s32.totalorder %s30, 0
      %p407 = por %p405, %p406
      %p408 = scmp.ne.s32.totalorder %s400, %s402
      %p409 = scmp.eq.s32.totalorder %s35, 1
      %p410 = por %p408, %p409
      %p411 = scmp.ne.s32.totalorder %s402, %s403
      %p412 = scmp.eq.s32.totalorder %s35, 0
      %p413 = por %p411, %p412
      %p414 = scmp.ne.s32.totalorder %s402, %s403
      %p415 = scmp.eq.s32.totalorder %s36, 1
      %p416 = por %p414, %p415
      %p418 = scmp.ne.s32.totalorder %s403, %s417
      %p419 = scmp.eq.s32.totalorder %s36, 0
      %p420 = por %p418, %p419
      %s422 = sadd.s32 %s421, 1
      %p425 = scmp.eq.s32.totalorder %s30, 1
      %p426 = scmp.ne.s32.totalorder %s421, %s423
      %p427 = scmp.eq.s32.totalorder %s30, 0
      %p428 = por %p426, %p427
      %p429 = scmp.ne.s32.totalorder %s421, %s423
      %p430 = scmp.eq.s32.totalorder %s35, 1
      %p431 = por %p429, %p430
      %p432 = scmp.ne.s32.totalorder %s423, %s424
      %p433 = scmp.eq.s32.totalorder %s35, 0
      %p434 = por %p432, %p433
      %p435 = scmp.ne.s32.totalorder %s423, %s424
      %p436 = scmp.eq.s32.totalorder %s36, 1
      %p437 = por %p435, %p436
      %p439 = scmp.ne.s32.totalorder %s424, %s438
      %p440 = scmp.eq.s32.totalorder %s36, 0
      %p441 = por %p439, %p440
      %s443 = sadd.s32 %s442, 1
      %p446 = scmp.eq.s32.totalorder %s30, 1
      %p447 = scmp.ne.s32.totalorder %s442, %s444
      %p448 = scmp.eq.s32.totalorder %s30, 0
      %p449 = por %p447, %p448
      %p450 = scmp.ne.s32.totalorder %s442, %s444
      %p451 = scmp.eq.s32.totalorder %s35, 1
      %p452 = por %p450, %p451
      %p453 = scmp.ne.s32.totalorder %s444, %s445
      %p454 = scmp.eq.s32.totalorder %s35, 0
      %p455 = por %p453, %p454
      %p456 = scmp.ne.s32.totalorder %s444, %s445
      %p457 = scmp.eq.s32.totalorder %s36, 1
      %p458 = por %p456, %p457
      %p460 = scmp.ne.s32.totalorder %s445, %s459
      %p461 = scmp.eq.s32.totalorder %s36, 0
      %p462 = por %p460, %p461
      %s464 = sadd.s32 %s463, 1
      %p467 = scmp.eq.s32.totalorder %s30, 1
      %p468 = scmp.ne.s32.totalorder %s463, %s465
      %p469 = scmp.eq.s32.totalorder %s30, 0
      %p470 = por %p468, %p469
      %p471 = scmp.ne.s32.totalorder %s463, %s465
      %p472 = scmp.eq.s32.totalorder %s35, 1
      %p473 = por %p471, %p472
      %p474 = scmp.ne.s32.totalorder %s465, %s466
      %p475 = scmp.eq.s32.totalorder %s35, 0
      %p476 = por %p474, %p475
      %p477 = scmp.ne.s32.totalorder %s465, %s466
      %p478 = scmp.eq.s32.totalorder %s36, 1
      %p479 = por %p477, %p478
      %p481 = scmp.ne.s32.totalorder %s466, %s480
      %p482 = scmp.eq.s32.totalorder %s36, 0
      %p483 = por %p481, %p482
      %s485 = sadd.s32 %s484, 1
      %p488 = scmp.eq.s32.totalorder %s30, 1
      %p489 = scmp.ne.s32.totalorder %s484, %s486
      %p490 = scmp.eq.s32.totalorder %s30, 0
      %p491 = por %p489, %p490
      %p492 = scmp.ne.s32.totalorder %s484, %s486
      %p493 = scmp.eq.s32.totalorder %s35, 1
      %p494 = por %p492, %p493
      %p495 = scmp.ne.s32.totalorder %s486, %s487
      %p496 = scmp.eq.s32.totalorder %s35, 0
      %p497 = por %p495, %p496
      %p498 = scmp.ne.s32.totalorder %s486, %s487
      %p499 = scmp.eq.s32.totalorder %s36, 1
      %p500 = por %p498, %p499
      %p502 = scmp.ne.s32.totalorder %s487, %s501
      %p503 = scmp.eq.s32.totalorder %s36, 0
      %p504 = por %p502, %p503
      %s505 = ssub.s32 %s30, %s37
      %p506 = scmp.eq.s32.totalorder %s505, 0
      %s508 = sadd.s32 %s507, 1
      %s509 = scalar_select %p506, %s507, %s508
      %p512 = pneg %p506
      %p513 = scmp.eq.s32.totalorder %s30, 1
      %p514 = por %p512, %p513
      %p515 = scmp.ne.s32.totalorder %s507, %s510
      %p516 = scmp.eq.s32.totalorder %s30, 0
      %p517 = por %p515, %p516
      %p518 = scmp.ne.s32.totalorder %s507, %s510
      %p519 = scmp.eq.s32.totalorder %s35, 1
      %p520 = por %p518, %p519
      %p521 = scmp.ne.s32.totalorder %s510, %s511
      %p522 = scmp.eq.s32.totalorder %s35, 0
      %p523 = por %p521, %p522
      %p524 = scmp.ne.s32.totalorder %s510, %s511
      %p525 = scmp.eq.s32.totalorder %s36, 1
      %p526 = por %p524, %p525
      %p528 = scmp.ne.s32.totalorder %s511, %s527
      %p529 = scmp.eq.s32.totalorder %s36, 0
      %p530 = por %p528, %p529
      %p531 = scmp.le.s32.totalorder 1, %s30
      %p532 = scmp.lt.s32.totalorder %s30, 3
      %p533 = pnand %p531, %p532
      %p534 = pneg %p533
      // Predicated region
      $region9: #{tpu_custom_call.1} parent=5 // pred_check
        _
      $region10: #{tpu_custom_call.1} parent=5 // pred_check_branch
        %536 = sbr.rel (%p533) target = $region12
      $region11: #{tpu_custom_call.1} parent=5 // pred_region
        %s537 = ssub.s32 %s30, 1
        // Predicated region
        $region13: #{tpu_custom_call.1} parent=11 // pred_check
          %p538 = pneg %p77
        $region14: #{tpu_custom_call.1} parent=11 // pred_check_branch
          %540 = sbr.rel (%p538) target = $region16
        $region15: #{tpu_custom_call.1} parent=11 // pred_region
          _
        $region16: #{tpu_custom_call.1} parent=11 // pred_fallthru
          _
        // Predicated region
        $region17: #{tpu_custom_call.1} parent=11 // pred_check
          %p541 = pneg %p98
        $region18: #{tpu_custom_call.1} parent=11 // pred_check_branch
          %543 = sbr.rel (%p541) target = $region20
        $region19: #{tpu_custom_call.1} parent=11 // pred_region
          _
        $region20: #{tpu_custom_call.1} parent=11 // pred_fallthru
          _
        // Predicated region
        $region21: #{tpu_custom_call.1} parent=11 // pred_check
          %p544 = pneg %p119
        $region22: #{tpu_custom_call.1} parent=11 // pred_check_branch
          %546 = sbr.rel (%p544) target = $region24
        $region23: #{tpu_custom_call.1} parent=11 // pred_region
          _
        $region24: #{tpu_custom_call.1} parent=11 // pred_fallthru
          _
        // Predicated region
        $region25: #{tpu_custom_call.1} parent=11 // pred_check
          %p547 = pneg %p140
        $region26: #{tpu_custom_call.1} parent=11 // pred_check_branch
          %549 = sbr.rel (%p547) target = $region28
        $region27: #{tpu_custom_call.1} parent=11 // pred_region
          %551 = vsyncadd [#allocation7], 0
          %s552 = sshll.u32 %s4, 4
          %s553 = int_to_ptr.hbm [resolvable:$true] %s552
          %s554 = sshll.u32 [#allocation6], 4
          %s555 = int_to_ptr.vmem [resolvable:$true] %s554
          %560 = dma.hbm_to_vmem [thread:$0]  %s553, 6144, %s555, [#allocation7], 64, 64, 4
        $region28: #{tpu_custom_call.1} parent=11 // pred_fallthru
          _
        // Predicated region
        $region29: #{tpu_custom_call.1} parent=11 // pred_check
          %p561 = pneg %p161
        $region30: #{tpu_custom_call.1} parent=11 // pred_check_branch
          %563 = sbr.rel (%p561) target = $region32
        $region31: #{tpu_custom_call.1} parent=11 // pred_region
          _
        $region32: #{tpu_custom_call.1} parent=11 // pred_fallthru
          _
        // Predicated region
        $region33: #{tpu_custom_call.1} parent=11 // pred_check
          %p564 = pneg %p182
        $region34: #{tpu_custom_call.1} parent=11 // pred_check_branch
          %566 = sbr.rel (%p564) target = $region36
        $region35: #{tpu_custom_call.1} parent=11 // pred_region
          _
        $region36: #{tpu_custom_call.1} parent=11 // pred_fallthru
          _
        // Predicated region
        $region37: #{tpu_custom_call.1} parent=11 // pred_check
          %p567 = pneg %p203
        $region38: #{tpu_custom_call.1} parent=11 // pred_check_branch
          %569 = sbr.rel (%p567) target = $region40
        $region39: #{tpu_custom_call.1} parent=11 // pred_region
          _
        $region40: #{tpu_custom_call.1} parent=11 // pred_fallthru
          _
        // Predicated region
        $region41: #{tpu_custom_call.1} parent=11 // pred_check
          %p570 = pneg %p224
        $region42: #{tpu_custom_call.1} parent=11 // pred_check_branch
          %572 = sbr.rel (%p570) target = $region44
        $region43: #{tpu_custom_call.1} parent=11 // pred_region
          _
        $region44: #{tpu_custom_call.1} parent=11 // pred_fallthru
          _
        // Predicated region
        $region45: #{tpu_custom_call.1} parent=11 // pred_check
          %p573 = pneg %p245
        $region46: #{tpu_custom_call.1} parent=11 // pred_check_branch
          %575 = sbr.rel (%p573) target = $region48
        $region47: #{tpu_custom_call.1} parent=11 // pred_region
          _
        $region48: #{tpu_custom_call.1} parent=11 // pred_fallthru
          _
        // Predicated region
        $region49: #{tpu_custom_call.1} parent=11 // pred_check
          %p576 = pneg %p266
        $region50: #{tpu_custom_call.1} parent=11 // pred_check_branch
          %578 = sbr.rel (%p576) target = $region52
        $region51: #{tpu_custom_call.1} parent=11 // pred_region
          _
        $region52: #{tpu_custom_call.1} parent=11 // pred_fallthru
          _
        // Predicated region
        $region53: #{tpu_custom_call.1} parent=11 // pred_check
          %p579 = pneg %p287
        $region54: #{tpu_custom_call.1} parent=11 // pred_check_branch
          %581 = sbr.rel (%p579) target = $region56
        $region55: #{tpu_custom_call.1} parent=11 // pred_region
          _
        $region56: #{tpu_custom_call.1} parent=11 // pred_fallthru
          _
        // Predicated region
        $region57: #{tpu_custom_call.1} parent=11 // pred_check
          %p582 = pneg %p308
        $region58: #{tpu_custom_call.1} parent=11 // pred_check_branch
          %584 = sbr.rel (%p582) target = $region60
        $region59: #{tpu_custom_call.1} parent=11 // pred_region
          _
        $region60: #{tpu_custom_call.1} parent=11 // pred_fallthru
          _
        // Predicated region
        $region61: #{tpu_custom_call.1} parent=11 // pred_check
          %p585 = pneg %p329
        $region62: #{tpu_custom_call.1} parent=11 // pred_check_branch
          %587 = sbr.rel (%p585) target = $region64
        $region63: #{tpu_custom_call.1} parent=11 // pred_region
          _
        $region64: #{tpu_custom_call.1} parent=11 // pred_fallthru
          _
        // Predicated region
        $region65: #{tpu_custom_call.1} parent=11 // pred_check
          %p588 = pneg %p350
        $region66: #{tpu_custom_call.1} parent=11 // pred_check_branch
          %590 = sbr.rel (%p588) target = $region68
        $region67: #{tpu_custom_call.1} parent=11 // pred_region
          _
        $region68: #{tpu_custom_call.1} parent=11 // pred_fallthru
          _
        // Predicated region
        $region69: #{tpu_custom_call.1} parent=11 // pred_check
          %p591 = pneg %p371
        $region70: #{tpu_custom_call.1} parent=11 // pred_check_branch
          %593 = sbr.rel (%p591) target = $region72
        $region71: #{tpu_custom_call.1} parent=11 // pred_region
          _
        $region72: #{tpu_custom_call.1} parent=11 // pred_fallthru
          _
        // Predicated region
        $region73: #{tpu_custom_call.1} parent=11 // pred_check
          %p594 = pneg %p392
        $region74: #{tpu_custom_call.1} parent=11 // pred_check_branch
          %596 = sbr.rel (%p594) target = $region76
        $region75: #{tpu_custom_call.1} parent=11 // pred_region
          %598 = vsyncadd [#allocation9], 0
          %s599 = sshll.u32 %s16, 4
          %s600 = int_to_ptr.hbm [resolvable:$true] %s599
          %s601 = sshll.u32 [#allocation8], 4
          %s602 = int_to_ptr.vmem [resolvable:$true] %s601
          %607 = dma.hbm_to_vmem [thread:$0]  %s600, 4096, %s602, [#allocation9], 128, 128, 8
        $region76: #{tpu_custom_call.1} parent=11 // pred_fallthru
          _
        // Predicated region
        $region77: #{tpu_custom_call.1} parent=11 // pred_check
          %p608 = pneg %p413
        $region78: #{tpu_custom_call.1} parent=11 // pred_check_branch
          %610 = sbr.rel (%p608) target = $region80
        $region79: #{tpu_custom_call.1} parent=11 // pred_region
          _
        $region80: #{tpu_custom_call.1} parent=11 // pred_fallthru
          _
        // Predicated region
        $region81: #{tpu_custom_call.1} parent=11 // pred_check
          %p611 = pneg %p434
        $region82: #{tpu_custom_call.1} parent=11 // pred_check_branch
          %613 = sbr.rel (%p611) target = $region84
        $region83: #{tpu_custom_call.1} parent=11 // pred_region
          _
        $region84: #{tpu_custom_call.1} parent=11 // pred_fallthru
          _
        // Predicated region
        $region85: #{tpu_custom_call.1} parent=11 // pred_check
          %p614 = pneg %p455
        $region86: #{tpu_custom_call.1} parent=11 // pred_check_branch
          %616 = sbr.rel (%p614) target = $region88
        $region87: #{tpu_custom_call.1} parent=11 // pred_region
          _
        $region88: #{tpu_custom_call.1} parent=11 // pred_fallthru
          _
        // Predicated region
        $region89: #{tpu_custom_call.1} parent=11 // pred_check
          %p617 = pneg %p476
        $region90: #{tpu_custom_call.1} parent=11 // pred_check_branch
          %619 = sbr.rel (%p617) target = $region92
        $region91: #{tpu_custom_call.1} parent=11 // pred_region
          _
        $region92: #{tpu_custom_call.1} parent=11 // pred_fallthru
          _
        // Predicated region
        $region93: #{tpu_custom_call.1} parent=11 // pred_check
          %p620 = pneg %p497
        $region94: #{tpu_custom_call.1} parent=11 // pred_check_branch
          %622 = sbr.rel (%p620) target = $region96
        $region95: #{tpu_custom_call.1} parent=11 // pred_region
          %624 = vsyncadd [#allocation9], 0
          %s625 = sshll.u32 %s21, 4
          %s626 = int_to_ptr.hbm [resolvable:$true] %s625
          %s627 = sshll.u32 [#allocation10], 4
          %s628 = int_to_ptr.vmem [resolvable:$true] %s627
          %633 = dma.hbm_to_vmem [thread:$0]  %s626, 6144, %s628, [#allocation9], 128, 128, 8
        $region96: #{tpu_custom_call.1} parent=11 // pred_fallthru
          _
      $region12: #{tpu_custom_call.1} parent=5 // pred_fallthru
        _
      %p634 = scmp.lt.s32.totalorder %s30, 2
      // Predicated region
      $region97: #{tpu_custom_call.1} parent=5 // pred_check
        %p635 = pneg %p634
      $region98: #{tpu_custom_call.1} parent=5 // pred_check_branch
        %637 = sbr.rel (%p635) target = $region100
      $region99: #{tpu_custom_call.1} parent=5 // pred_region
        // Predicated region
        $region101: #{tpu_custom_call.1} parent=99 // pred_check
          %p638 = pneg %p50
        $region102: #{tpu_custom_call.1} parent=99 // pred_check_branch
          %640 = sbr.rel (%p638) target = $region104
        $region103: #{tpu_custom_call.1} parent=99 // pred_region
          %p641 = scmp.lt.s32.totalorder %s30, 1
          %s642 = scalar_select %p641, %s30, 1
          %s643 = smul.addr %s642, 6
          %s644 = smul.addr %s643, 8
          %s645 = scalar_lea.vmem %s0, %s644
        $region104: #{tpu_custom_call.1} parent=99 // pred_fallthru
          _
      $region100: #{tpu_custom_call.1} parent=5 // pred_fallthru
        _
      %p646 = scmp.le.s32.totalorder 1, %s30
      %p647 = scmp.lt.s32.totalorder %s30, 3
      %p648 = pnand %p646, %p647
      %p649 = pneg %p648
      // Predicated region
      $region105: #{tpu_custom_call.1} parent=5 // pred_check
        _
      $region106: #{tpu_custom_call.1} parent=5 // pred_check_branch
        %651 = sbr.rel (%p648) target = $region108
      $region107: #{tpu_custom_call.1} parent=5 // pred_region
        %s652 = ssub.s32 %s30, 1
        // Predicated region
        $region109: #{tpu_custom_call.1} parent=107 // pred_check
          %p653 = pneg %p140
        $region110: #{tpu_custom_call.1} parent=107 // pred_check_branch
          %655 = sbr.rel (%p653) target = $region112
        $region111: #{tpu_custom_call.1} parent=107 // pred_region
          %657 = dma.done [#allocation7], 6144
        $region112: #{tpu_custom_call.1} parent=107 // pred_fallthru
          _
        // Predicated region
        $region113: #{tpu_custom_call.1} parent=107 // pred_check
          %p658 = pneg %p392
        $region114: #{tpu_custom_call.1} parent=107 // pred_check_branch
          %660 = sbr.rel (%p658) target = $region116
        $region115: #{tpu_custom_call.1} parent=107 // pred_region
          %662 = dma.done [#allocation9], 4096
        $region116: #{tpu_custom_call.1} parent=107 // pred_fallthru
          _
        // Predicated region
        $region117: #{tpu_custom_call.1} parent=107 // pred_check
          %p663 = pneg %p497
        $region118: #{tpu_custom_call.1} parent=107 // pred_check_branch
          %665 = sbr.rel (%p663) target = $region120
        $region119: #{tpu_custom_call.1} parent=107 // pred_region
          %667 = dma.done [#allocation9], 6144
        $region120: #{tpu_custom_call.1} parent=107 // pred_fallthru
          _
        %p668 = scmp.lt.s32.totalorder %s35, 1
        %s669 = scalar_select %p668, %s35, 1
        %s670 = smul.addr %s669, 6
        %s671 = smul.addr %s670, 8
        %s672 = scalar_lea.vmem %s0, %s671
        %p673 = pneg %p56
        %p674 = pneg %p53
        %p675 = pneg %p77
        %p676 = pneg %p74
        %p677 = pneg %p98
        %p678 = pneg %p95
        %p679 = pneg %p119
        %p680 = pneg %p116
        %p681 = pneg %p140
        %p682 = pneg %p137
        %p683 = pneg %p161
        %p684 = pneg %p158
        %p685 = pneg %p182
        %p686 = pneg %p179
        %p687 = pneg %p203
        %p688 = pneg %p200
        %p689 = pneg %p224
        %p690 = pneg %p221
        %p691 = pneg %p245
        %p692 = pneg %p242
        %p693 = pneg %p266
        %p694 = pneg %p263
        %p695 = pneg %p287
        %p696 = pneg %p284
        %p697 = pneg %p308
        %p698 = pneg %p305
        %p699 = pneg %p329
        %p700 = pneg %p326
        %p701 = pneg %p350
        %p702 = pneg %p347
        %p703 = pneg %p371
        %p704 = pneg %p368
        %p705 = pneg %p392
        %p706 = pneg %p389
        %p707 = pneg %p413
        %p708 = pneg %p410
        %p709 = pneg %p434
        %p710 = pneg %p431
        %p711 = pneg %p455
        %p712 = pneg %p452
        %p713 = pneg %p476
        %p714 = pneg %p473
        %p715 = pneg %p497
        %p716 = pneg %p494
        %p717 = pneg %p523
        %p718 = pneg %p520
        %p719 = scmp.lt.s32.totalorder %s35, 1
        %s720 = scalar_select %p719, %s35, 1
        %s721 = smul.addr %s720, 6
        %s722 = smul.addr %s721, 8
        %s723 = scalar_lea.vmem %s22, %s722
        %p724 = scmp.lt.s32.totalorder %s35, 1
        %s725 = scalar_select %p724, %s35, 1
        %s726 = smul.addr %s725, 6
        %s727 = smul.addr %s726, 8
        %s728 = scalar_lea.vmem %s0, %s727
        %p729 = scmp.lt.s32.totalorder %s35, 1
        %s730 = scalar_select %p729, %s35, 1
        %s731 = smul.addr %s730, 6
        %s732 = smul.addr %s731, 8
        %s733 = scalar_lea.vmem %s22, %s732
        %735 = vst [vmem:[#allocation3 + $0x6] sm:$0x3] 0.0
        %736 = vst [vmem:[#allocation3 + $0x18] sm:$0x3] 0.0
        %737 = vst [vmem:[#allocation4] sm:$0x8] 0
        %738 = vst [vmem:[#allocation4 + $0xc] sm:$0x1] 0
        %v739 = vld [vmem:[%s1] sm:$0xff]
        %v740 = vld [vmem:[%s1 + $0x8] sm:$0xff]
        %v741 = vld [vmem:[%s1 + $0x10] sm:$0x3]
        %v742 = vld [vmem:[%s1 + $0x1] sm:$0xff]
        %v743 = vld [vmem:[%s1 + $0x9] sm:$0xff]
        %v744 = vld [vmem:[%s728] sm:$0xff]
        %v745 = vld [vmem:[%s728 + $0x8] sm:$0xff]
        %v746 = vld [vmem:[%s728 + $0x10] sm:$0xff]
        %v747 = vld [vmem:[%s728 + $0x18] sm:$0xff]
        %v748 = vld [vmem:[%s728 + $0x20] sm:$0x3]
        %v749 = vld [vmem:[%s728 + $0x28] sm:$0x3]
        %v750 = vld [vmem:[%s2] sm:$0x3]
        %v752 = vperm.slane %v750, 0
        %v753 = vperm.slane %v750, 1
        %v756 = vmul.f32 %v744, %v752
        %v757 = vmul.f32 %v745, %v753
        %v758 = vmul.f32 %v746, %v752
        %v759 = vmul.f32 %v747, %v753
        %v760 = vmul.f32 %v748, %v752
        %v761 = vmul.f32 %v749, %v753
        %v762 = vld [vmem:[%s3] sm:$0x3]
        %v764 = vperm.slane %v762, 0
        %v765 = vperm.slane %v762, 1
        %v768 = vadd.f32 %v756, %v764
        %v769 = vadd.f32 %v757, %v765
        %v770 = vadd.f32 %v758, %v764
        %v771 = vadd.f32 %v759, %v765
        %v772 = vadd.f32 %v760, %v764
        %v773 = vadd.f32 %v761, %v765
        %v774 = vmul.f32 %v768, 0.5
        %v775 = vmul.f32 %v769, 0.5
        %v776 = vmul.f32 %v770, 0.5
        %v777 = vmul.f32 %v771, 0.5
        %v778 = vmul.f32 %v772, 0.5
        %v779 = vmul.f32 %v773, 0.5
        %v780 = vmul.f32 %v768, 0.044715
        %v781 = vmul.f32 %v769, 0.044715
        %v782 = vmul.f32 %v770, 0.044715
        %v783 = vmul.f32 %v771, 0.044715
        %v784 = vmul.f32 %v772, 0.044715
        %v785 = vmul.f32 %v773, 0.044715
        %v786 = vmul.f32 %v780, %v768
        %v787 = vmul.f32 %v781, %v769
        %v788 = vmul.f32 %v782, %v770
        %v789 = vmul.f32 %v783, %v771
        %v790 = vmul.f32 %v784, %v772
        %v791 = vmul.f32 %v785, %v773
        %v792 = vmul.f32 %v786, %v768
        %v793 = vmul.f32 %v787, %v769
        %v794 = vmul.f32 %v788, %v770
        %v795 = vmul.f32 %v789, %v771
        %v796 = vmul.f32 %v790, %v772
        %v797 = vmul.f32 %v791, %v773
        %v798 = vadd.f32 %v768, %v792
        %v799 = vadd.f32 %v769, %v793
        %v800 = vadd.f32 %v770, %v794
        %v801 = vadd.f32 %v771, %v795
        %v802 = vadd.f32 %v772, %v796
        %v803 = vadd.f32 %v773, %v797
        %v804 = vmul.f32 %v798, 0.7978846
        %v805 = vmul.f32 %v799, 0.7978846
        %v806 = vmul.f32 %v800, 0.7978846
        %v807 = vmul.f32 %v801, 0.7978846
        %v808 = vmul.f32 %v802, 0.7978846
        %v809 = vmul.f32 %v803, 0.7978846
        %v810 = vtanh.pop %v804
        %v811 = vtanh.pop %v805
        %v812 = vtanh.pop %v806
        %v813 = vtanh.pop %v807
        %v814 = vtanh.pop %v808
        %v815 = vtanh.pop %v809
        %v816 = vadd.f32 %v810, 1.0
        %v817 = vadd.f32 %v811, 1.0
        %v818 = vadd.f32 %v812, 1.0
        %v819 = vadd.f32 %v813, 1.0
        %v820 = vadd.f32 %v814, 1.0
        %v821 = vadd.f32 %v815, 1.0
        %v822 = vmul.f32 %v774, %v816
        %v823 = vmul.f32 %v775, %v817
        %v824 = vmul.f32 %v776, %v818
        %v825 = vmul.f32 %v777, %v819
        %v826 = vmul.f32 %v778, %v820
        %v827 = vmul.f32 %v779, %v821
        %829 = vset.pattern.permute.xlu0 0
        %830 = vperm.xlu0 %829, %v739
        %v831 = vpop.permute.xlu0 %830
        %834 = vset.pattern.permute.xlu0 0
        %835 = vperm.xlu0 %834, %v740
        %v836 = vpop.permute.xlu0 %835
        %839 = vset.pattern.permute.xlu0 0
        %840 = vperm.xlu0 %839, %v741
        %v841 = vpop.permute.xlu0 %840
        %v843 = vmul.f32 %v822, %v831
        %v844 = vmul.f32 %v823, %v831
        %v845 = vmul.f32 %v824, %v836
        %v846 = vmul.f32 %v825, %v836
        %v847 = vmul.f32 %v826, %v841
        %v848 = vmul.f32 %v827, %v841
        %v849 = vpack.c.bf16 %v844, %v843
        %v850 = vpack.c.bf16 %v846, %v845
        %v851 = vpack.c.bf16 %v848, %v847
        %852 = vst [vmem:[#allocation2] sm:$0xff] %v849
        %853 = vst [vmem:[#allocation2 + $0x8] sm:$0xff] %v850
        %854 = vst [vmem:[#allocation2 + $0x10] sm:$0x11] %v851
        %v855 = vld [vmem:[#allocation2] sm:$0xff]
        %v856 = vld [vmem:[#allocation2 + $0x8] sm:$0xff]
        %v857 = vld [vmem:[#allocation6] sm:$0xf]
        %v858 = vld [vmem:[#allocation6 + $0x4] sm:$0xf]
        %v859 = vld [vmem:[#allocation6 + $0x8] sm:$0xf]
        %v860 = vld [vmem:[#allocation6 + $0xc] sm:$0xf]
        %v861 = vld [vmem:[#allocation6 + $0x10] sm:$0xf]
        %v862 = vld [vmem:[#allocation6 + $0x14] sm:$0xf]
        %v863 = vld [vmem:[#allocation6 + $0x18] sm:$0xf]
        %v864 = vld [vmem:[#allocation6 + $0x1c] sm:$0xf]
        %v865 = vld [vmem:[#allocation6 + $0x20] sm:$0xf]
        %v866 = vld [vmem:[#allocation6 + $0x24] sm:$0xf]
        %v867 = vld [vmem:[#allocation6 + $0x28] sm:$0xf]
        %v868 = vld [vmem:[#allocation6 + $0x2c] sm:$0xf]
        %v869 = vld [vmem:[#allocation6 + $0x30] sm:$0xf]
        %v870 = vld [vmem:[#allocation6 + $0x34] sm:$0xf]
        %v871 = vld [vmem:[#allocation6 + $0x38] sm:$0xf]
        %v872 = vld [vmem:[#allocation6 + $0x3c] sm:$0xf]
        %v873 = vld [vmem:[#allocation6 + $0x40] sm:$0xf]
        %v874 = vld [vmem:[#allocation6 + $0x44] sm:$0xf]
        %v875 = vld [vmem:[#allocation6 + $0x48] sm:$0xf]
        %v876 = vld [vmem:[#allocation6 + $0x4c] sm:$0xf]
        %v877 = vld [vmem:[#allocation6 + $0x50] sm:$0xf]
        %v878 = vld [vmem:[#allocation6 + $0x54] sm:$0xf]
        %v879 = vld [vmem:[#allocation6 + $0x58] sm:$0xf]
        %v880 = vld [vmem:[#allocation6 + $0x5c] sm:$0xf]
        %v881 = vld [vmem:[#allocation6 + $0x60] sm:$0xf]
        %v882 = vld [vmem:[#allocation6 + $0x64] sm:$0xf]
        %v883 = vld [vmem:[#allocation6 + $0x68] sm:$0xf]
        %v884 = vld [vmem:[#allocation6 + $0x6c] sm:$0xf]
        %v885 = vld [vmem:[#allocation6 + $0x70] sm:$0xf]
        %v886 = vld [vmem:[#allocation6 + $0x74] sm:$0xf]
        %v887 = vld [vmem:[#allocation6 + $0x78] sm:$0xf]
        %v888 = vld [vmem:[#allocation6 + $0x7c] sm:$0xf]
        %v889 = vld [vmem:[#allocation2 + $0x10] sm:$0x11]
        %s890 = scalar_lea.vmem [#allocation6], 128
        %v891 = vld [vmem:[%s890] sm:$0xf]
        %v892 = vld [vmem:[%s890 + $0x4] sm:$0xf]
        %v893 = vld [vmem:[%s890 + $0x8] sm:$0xf]
        %v894 = vld [vmem:[%s890 + $0xc] sm:$0xf]
        %v895 = vld [vmem:[%s890 + $0x10] sm:$0xf]
        %v896 = vld [vmem:[%s890 + $0x14] sm:$0xf]
        %v897 = vld [vmem:[%s890 + $0x18] sm:$0xf]
        %v898 = vld [vmem:[%s890 + $0x1c] sm:$0xf]
        %v899 = vld [vmem:[%s890 + $0x20] sm:$0xf]
        %v900 = vld [vmem:[%s890 + $0x24] sm:$0xf]
        %v901 = vld [vmem:[%s890 + $0x28] sm:$0xf]
        %v902 = vld [vmem:[%s890 + $0x2c] sm:$0xf]
        %v903 = vld [vmem:[%s890 + $0x30] sm:$0xf]
        %v904 = vld [vmem:[%s890 + $0x34] sm:$0xf]
        %v905 = vld [vmem:[%s890 + $0x38] sm:$0xf]
        %v906 = vld [vmem:[%s890 + $0x3c] sm:$0xf]
        %v907 = vld [vmem:[%s890 + $0x40] sm:$0xf]
        %v908 = vld [vmem:[%s890 + $0x44] sm:$0xf]
        %v909 = vld [vmem:[%s890 + $0x48] sm:$0xf]
        %v910 = vld [vmem:[%s890 + $0x4c] sm:$0xf]
        %v911 = vld [vmem:[%s890 + $0x50] sm:$0xf]
        %v912 = vld [vmem:[%s890 + $0x54] sm:$0xf]
        %v913 = vld [vmem:[%s890 + $0x58] sm:$0xf]
        %v914 = vld [vmem:[%s890 + $0x5c] sm:$0xf]
        %v915 = vld [vmem:[%s890 + $0x60] sm:$0xf]
        %v916 = vld [vmem:[%s890 + $0x64] sm:$0xf]
        %v917 = vld [vmem:[%s890 + $0x68] sm:$0xf]
        %v918 = vld [vmem:[%s890 + $0x6c] sm:$0xf]
        %v919 = vld [vmem:[%s890 + $0x70] sm:$0xf]
        %v920 = vld [vmem:[%s890 + $0x74] sm:$0xf]
        %v921 = vld [vmem:[%s890 + $0x78] sm:$0xf]
        %v922 = vld [vmem:[%s890 + $0x7c] sm:$0xf]
        %v926 = vunpack.c.l.b16 %v855
        %v927 = vunpack.c.h.b16 %v855
        %v928 = vunpack.c.l.b16 %v856
        %v929 = vunpack.c.h.b16 %v856
        %v930 = vunpack.c.l.b16 %v889
        %v931 = vunpack.c.h.b16 %v889
        %v932 = vpack.c.b16 %v928, %v926
        %v933 = vpack.c.b16 %v929, %v927
        %v934 = vpack.c.b16 %v930, %v930
        %v935 = vpack.c.b16 %v931, %v931
        %vm936 = vsmask.f32 7424
        %v938 = vshrl.u32 %v932, 16
        %v940 = vshll.u32 %v932, 16
        %v942 = vrot.slane %v940, 1
        %v943 = vor.u32 %v938, %v942
        %v945 = vshll.u32 %v934, 16
        %v947 = vrot.slane %v945, 1
        %v948 = vsel %vm936, %v943, %v947
        %v950 = vshrl.u32 %v933, 16
        %v952 = vshll.u32 %v933, 16
        %v954 = vrot.slane %v952, 1
        %v955 = vor.u32 %v950, %v954
        %v957 = vshll.u32 %v935, 16
        %v959 = vrot.slane %v957, 1
        %v960 = vsel %vm936, %v955, %v959
        %v995 = vunpack.c.l.b16 %v891
        %v996 = vunpack.c.l.b16 %v892
        %v997 = vunpack.c.l.b16 %v893
        %v998 = vunpack.c.l.b16 %v894
        %v999 = vunpack.c.l.b16 %v895
        %v1000 = vunpack.c.l.b16 %v896
        %v1001 = vunpack.c.l.b16 %v897
        %v1002 = vunpack.c.l.b16 %v898
        %v1003 = vunpack.c.l.b16 %v899
        %v1004 = vunpack.c.l.b16 %v900
        %v1005 = vunpack.c.l.b16 %v901
        %v1006 = vunpack.c.l.b16 %v902
        %v1007 = vunpack.c.l.b16 %v903
        %v1008 = vunpack.c.l.b16 %v904
        %v1009 = vunpack.c.l.b16 %v905
        %v1010 = vunpack.c.l.b16 %v906
        %v1011 = vunpack.c.l.b16 %v907
        %v1012 = vunpack.c.l.b16 %v908
        %v1013 = vunpack.c.l.b16 %v909
        %v1014 = vunpack.c.l.b16 %v910
        %v1015 = vunpack.c.l.b16 %v911
        %v1016 = vunpack.c.l.b16 %v912
        %v1017 = vunpack.c.l.b16 %v913
        %v1018 = vunpack.c.l.b16 %v914
        %v1019 = vunpack.c.l.b16 %v915
        %v1020 = vunpack.c.l.b16 %v916
        %v1021 = vunpack.c.l.b16 %v917
        %v1022 = vunpack.c.l.b16 %v918
        %v1023 = vunpack.c.l.b16 %v919
        %v1024 = vunpack.c.l.b16 %v920
        %v1025 = vunpack.c.l.b16 %v921
        %v1026 = vunpack.c.l.b16 %v922
        %v1027 = vpack.c.b16 %v996, %v995
        %v1028 = vpack.c.b16 %v998, %v997
        %v1029 = vpack.c.b16 %v1000, %v999
        %v1030 = vpack.c.b16 %v1002, %v1001
        %v1031 = vpack.c.b16 %v1004, %v1003
        %v1032 = vpack.c.b16 %v1006, %v1005
        %v1033 = vpack.c.b16 %v1008, %v1007
        %v1034 = vpack.c.b16 %v1010, %v1009
        %v1035 = vpack.c.b16 %v1012, %v1011
        %v1036 = vpack.c.b16 %v1014, %v1013
        %v1037 = vpack.c.b16 %v1016, %v1015
        %v1038 = vpack.c.b16 %v1018, %v1017
        %v1039 = vpack.c.b16 %v1020, %v1019
        %v1040 = vpack.c.b16 %v1022, %v1021
        %v1041 = vpack.c.b16 %v1024, %v1023
        %v1042 = vpack.c.b16 %v1026, %v1025
        %1059 = vmatpush.bf16.msra.mxu0 %v1034
        %1060 = vmatpush.bf16.msra.mxu0 %v1033
        %1061 = vmatpush.bf16.msra.mxu0 %v1032
        %1062 = vmatpush.bf16.msra.mxu0 %v1031
        %1063 = vmatpush.bf16.msra.mxu0 %v1030
        %1064 = vmatpush.bf16.msra.mxu0 %v1029
        %1065 = vmatpush.bf16.msra.mxu0 %v1028
        %1066 = vmatpush.bf16.msra.mxu0 %v1027
        %1067 = vmatmul.bf16.gmra.mxu0 %v948
        %v1068 = vpop.f32.mrf.mxu0
        %v1069 = vadd.f32 0.0, %v1068
        %v1070 = vpop.f32.mrf.mxu0
        %v1071 = vadd.f32 0.0, %v1070
        %1072 = vdwg.mxu0
        %1073 = vmatpush.bf16.msra.mxu0 %v1042
        %1074 = vmatpush.bf16.msra.mxu0 %v1041
        %1075 = vmatpush.bf16.msra.mxu0 %v1040
        %1076 = vmatpush.bf16.msra.mxu0 %v1039
        %1077 = vmatpush.bf16.msra.mxu0 %v1038
        %1078 = vmatpush.bf16.msra.mxu0 %v1037
        %1079 = vmatpush.bf16.msra.mxu0 %v1036
        %1080 = vmatpush.bf16.msra.mxu0 %v1035
        %1081 = vmatmul.bf16.gmra.mxu0 %v960
        %v1082 = vpop.f32.mrf.mxu0
        %v1083 = vadd.f32 %v1069, %v1082
        %v1084 = vpop.f32.mrf.mxu0
        %v1085 = vadd.f32 %v1071, %v1084
        %1086 = vdwg.mxu0
        %v1121 = vunpack.c.l.b16 %v857
        %v1122 = vunpack.c.l.b16 %v858
        %v1123 = vunpack.c.l.b16 %v859
        %v1124 = vunpack.c.l.b16 %v860
        %v1125 = vunpack.c.l.b16 %v861
        %v1126 = vunpack.c.l.b16 %v862
        %v1127 = vunpack.c.l.b16 %v863
        %v1128 = vunpack.c.l.b16 %v864
        %v1129 = vunpack.c.l.b16 %v865
        %v1130 = vunpack.c.l.b16 %v866
        %v1131 = vunpack.c.l.b16 %v867
        %v1132 = vunpack.c.l.b16 %v868
        %v1133 = vunpack.c.l.b16 %v869
        %v1134 = vunpack.c.l.b16 %v870
        %v1135 = vunpack.c.l.b16 %v871
        %v1136 = vunpack.c.l.b16 %v872
        %v1137 = vunpack.c.l.b16 %v873
        %v1138 = vunpack.c.l.b16 %v874
        %v1139 = vunpack.c.l.b16 %v875
        %v1140 = vunpack.c.l.b16 %v876
        %v1141 = vunpack.c.l.b16 %v877
        %v1142 = vunpack.c.l.b16 %v878
        %v1143 = vunpack.c.l.b16 %v879
        %v1144 = vunpack.c.l.b16 %v880
        %v1145 = vunpack.c.l.b16 %v881
        %v1146 = vunpack.c.l.b16 %v882
        %v1147 = vunpack.c.l.b16 %v883
        %v1148 = vunpack.c.l.b16 %v884
        %v1149 = vunpack.c.l.b16 %v885
        %v1150 = vunpack.c.l.b16 %v886
        %v1151 = vunpack.c.l.b16 %v887
        %v1152 = vunpack.c.l.b16 %v888
        %v1153 = vpack.c.b16 %v1122, %v1121
        %v1154 = vpack.c.b16 %v1124, %v1123
        %v1155 = vpack.c.b16 %v1126, %v1125
        %v1156 = vpack.c.b16 %v1128, %v1127
        %v1157 = vpack.c.b16 %v1130, %v1129
        %v1158 = vpack.c.b16 %v1132, %v1131
        %v1159 = vpack.c.b16 %v1134, %v1133
        %v1160 = vpack.c.b16 %v1136, %v1135
        %v1161 = vpack.c.b16 %v1138, %v1137
        %v1162 = vpack.c.b16 %v1140, %v1139
        %v1163 = vpack.c.b16 %v1142, %v1141
        %v1164 = vpack.c.b16 %v1144, %v1143
        %v1165 = vpack.c.b16 %v1146, %v1145
        %v1166 = vpack.c.b16 %v1148, %v1147
        %v1167 = vpack.c.b16 %v1150, %v1149
        %v1168 = vpack.c.b16 %v1152, %v1151
        %1185 = vmatpush.bf16.msra.mxu0 %v1160
        %1186 = vmatpush.bf16.msra.mxu0 %v1159
        %1187 = vmatpush.bf16.msra.mxu0 %v1158
        %1188 = vmatpush.bf16.msra.mxu0 %v1157
        %1189 = vmatpush.bf16.msra.mxu0 %v1156
        %1190 = vmatpush.bf16.msra.mxu0 %v1155
        %1191 = vmatpush.bf16.msra.mxu0 %v1154
        %1192 = vmatpush.bf16.msra.mxu0 %v1153
        %1193 = vmatmul.bf16.gmra.mxu0 %v932
        %v1194 = vpop.f32.mrf.mxu0
        %v1195 = vadd.f32 %v1083, %v1194
        %v1196 = vpop.f32.mrf.mxu0
        %v1197 = vadd.f32 %v1085, %v1196
        %1198 = vdwg.mxu0
        %1199 = vmatpush.bf16.msra.mxu0 %v1168
        %1200 = vmatpush.bf16.msra.mxu0 %v1167
        %1201 = vmatpush.bf16.msra.mxu0 %v1166
        %1202 = vmatpush.bf16.msra.mxu0 %v1165
        %1203 = vmatpush.bf16.msra.mxu0 %v1164
        %1204 = vmatpush.bf16.msra.mxu0 %v1163
        %1205 = vmatpush.bf16.msra.mxu0 %v1162
        %1206 = vmatpush.bf16.msra.mxu0 %v1161
        %1207 = vmatmul.bf16.gmra.mxu0 %v933
        %v1208 = vpop.f32.mrf.mxu0
        %v1209 = vadd.f32 %v1195, %v1208
        %v1210 = vpop.f32.mrf.mxu0
        %v1211 = vadd.f32 %v1197, %v1210
        %1212 = vdwg.mxu0
        %v1213 = vld [vmem:[#allocation2] sm:$0xee]
        %s1214 = scalar_lea.vmem [#allocation6], 256
        %v1215 = vld [vmem:[%s1214] sm:$0xf]
        %v1216 = vld [vmem:[%s1214 + $0x4] sm:$0xf]
        %v1217 = vld [vmem:[%s1214 + $0x8] sm:$0xf]
        %v1218 = vld [vmem:[%s1214 + $0xc] sm:$0xf]
        %v1219 = vld [vmem:[%s1214 + $0x10] sm:$0xf]
        %v1220 = vld [vmem:[%s1214 + $0x14] sm:$0xf]
        %v1221 = vld [vmem:[%s1214 + $0x18] sm:$0xf]
        %v1222 = vld [vmem:[%s1214 + $0x1c] sm:$0xf]
        %v1223 = vld [vmem:[%s1214 + $0x20] sm:$0xf]
        %v1224 = vld [vmem:[%s1214 + $0x24] sm:$0xf]
        %v1225 = vld [vmem:[%s1214 + $0x28] sm:$0xf]
        %v1226 = vld [vmem:[%s1214 + $0x2c] sm:$0xf]
        %v1227 = vld [vmem:[%s1214 + $0x30] sm:$0xf]
        %v1228 = vld [vmem:[%s1214 + $0x34] sm:$0xf]
        %v1229 = vld [vmem:[%s1214 + $0x38] sm:$0xf]
        %v1230 = vld [vmem:[%s1214 + $0x3c] sm:$0xf]
        %v1231 = vld [vmem:[%s1214 + $0x40] sm:$0xf]
        %v1232 = vld [vmem:[%s1214 + $0x44] sm:$0xf]
        %v1233 = vld [vmem:[%s1214 + $0x48] sm:$0xf]
        %v1234 = vld [vmem:[%s1214 + $0x4c] sm:$0xf]
        %v1235 = vld [vmem:[%s1214 + $0x50] sm:$0xf]
        %v1236 = vld [vmem:[%s1214 + $0x54] sm:$0xf]
        %v1237 = vld [vmem:[%s1214 + $0x58] sm:$0xf]
        %v1238 = vld [vmem:[%s1214 + $0x5c] sm:$0xf]
        %v1239 = vld [vmem:[%s1214 + $0x60] sm:$0xf]
        %v1240 = vld [vmem:[%s1214 + $0x64] sm:$0xf]
        %v1241 = vld [vmem:[%s1214 + $0x68] sm:$0xf]
        %v1242 = vld [vmem:[%s1214 + $0x6c] sm:$0xf]
        %v1243 = vld [vmem:[%s1214 + $0x70] sm:$0xf]
        %v1244 = vld [vmem:[%s1214 + $0x74] sm:$0xf]
        %v1245 = vld [vmem:[%s1214 + $0x78] sm:$0xf]
        %v1246 = vld [vmem:[%s1214 + $0x7c] sm:$0xf]
        %v1248 = vunpack.c.l.b16 %v1213
        %v1249 = vunpack.c.h.b16 %v1213
        %v1250 = vpack.c.b16 %v928, %v1248
        %v1251 = vpack.c.b16 %v929, %v1249
        %vm1252 = vcmask 1046528
        %v1253 = vrot.slane %v1250, 1
        %v1254 = vrot.slane %v934, 1
        %v1255 = vsel %vm1252, %v1253, %v1254
        %v1256 = vrot.slane %v1251, 1
        %v1257 = vrot.slane %v935, 1
        %v1258 = vsel %vm1252, %v1256, %v1257
        %v1293 = vunpack.c.l.b16 %v1215
        %v1294 = vunpack.c.l.b16 %v1216
        %v1295 = vunpack.c.l.b16 %v1217
        %v1296 = vunpack.c.l.b16 %v1218
        %v1297 = vunpack.c.l.b16 %v1219
        %v1298 = vunpack.c.l.b16 %v1220
        %v1299 = vunpack.c.l.b16 %v1221
        %v1300 = vunpack.c.l.b16 %v1222
        %v1301 = vunpack.c.l.b16 %v1223
        %v1302 = vunpack.c.l.b16 %v1224
        %v1303 = vunpack.c.l.b16 %v1225
        %v1304 = vunpack.c.l.b16 %v1226
        %v1305 = vunpack.c.l.b16 %v1227
        %v1306 = vunpack.c.l.b16 %v1228
        %v1307 = vunpack.c.l.b16 %v1229
        %v1308 = vunpack.c.l.b16 %v1230
        %v1309 = vunpack.c.l.b16 %v1231
        %v1310 = vunpack.c.l.b16 %v1232
        %v1311 = vunpack.c.l.b16 %v1233
        %v1312 = vunpack.c.l.b16 %v1234
        %v1313 = vunpack.c.l.b16 %v1235
        %v1314 = vunpack.c.l.b16 %v1236
        %v1315 = vunpack.c.l.b16 %v1237
        %v1316 = vunpack.c.l.b16 %v1238
        %v1317 = vunpack.c.l.b16 %v1239
        %v1318 = vunpack.c.l.b16 %v1240
        %v1319 = vunpack.c.l.b16 %v1241
        %v1320 = vunpack.c.l.b16 %v1242
        %v1321 = vunpack.c.l.b16 %v1243
        %v1322 = vunpack.c.l.b16 %v1244
        %v1323 = vunpack.c.l.b16 %v1245
        %v1324 = vunpack.c.l.b16 %v1246
        %v1325 = vpack.c.b16 %v1294, %v1293
        %v1326 = vpack.c.b16 %v1296, %v1295
        %v1327 = vpack.c.b16 %v1298, %v1297
        %v1328 = vpack.c.b16 %v1300, %v1299
        %v1329 = vpack.c.b16 %v1302, %v1301
        %v1330 = vpack.c.b16 %v1304, %v1303
        %v1331 = vpack.c.b16 %v1306, %v1305
        %v1332 = vpack.c.b16 %v1308, %v1307
        %v1333 = vpack.c.b16 %v1310, %v1309
        %v1334 = vpack.c.b16 %v1312, %v1311
        %v1335 = vpack.c.b16 %v1314, %v1313
        %v1336 = vpack.c.b16 %v1316, %v1315
        %v1337 = vpack.c.b16 %v1318, %v1317
        %v1338 = vpack.c.b16 %v1320, %v1319
        %v1339 = vpack.c.b16 %v1322, %v1321
        %v1340 = vpack.c.b16 %v1324, %v1323
        %1357 = vmatpush.bf16.msra.mxu0 %v1332
        %1358 = vmatpush.bf16.msra.mxu0 %v1331
        %1359 = vmatpush.bf16.msra.mxu0 %v1330
        %1360 = vmatpush.bf16.msra.mxu0 %v1329
        %1361 = vmatpush.bf16.msra.mxu0 %v1328
        %1362 = vmatpush.bf16.msra.mxu0 %v1327
        %1363 = vmatpush.bf16.msra.mxu0 %v1326
        %1364 = vmatpush.bf16.msra.mxu0 %v1325
        %1365 = vmatmul.bf16.gmra.mxu0 %v1255
        %v1366 = vpop.f32.mrf.mxu0
        %v1367 = vadd.f32 0.0, %v1366
        %v1368 = vpop.f32.mrf.mxu0
        %v1369 = vadd.f32 0.0, %v1368
        %1370 = vdwg.mxu0
        %1371 = vmatpush.bf16.msra.mxu0 %v1340
        %1372 = vmatpush.bf16.msra.mxu0 %v1339
        %1373 = vmatpush.bf16.msra.mxu0 %v1338
        %1374 = vmatpush.bf16.msra.mxu0 %v1337
        %1375 = vmatpush.bf16.msra.mxu0 %v1336
        %1376 = vmatpush.bf16.msra.mxu0 %v1335
        %1377 = vmatpush.bf16.msra.mxu0 %v1334
        %1378 = vmatpush.bf16.msra.mxu0 %v1333
        %1379 = vmatmul.bf16.gmra.mxu0 %v1258
        %v1380 = vpop.f32.mrf.mxu0
        %v1381 = vadd.f32 %v1367, %v1380
        %v1382 = vpop.f32.mrf.mxu0
        %v1383 = vadd.f32 %v1369, %v1382
        %1384 = vdwg.mxu0
        %v1385 = vadd.f32 %v1209, %v1381
        %v1386 = vadd.f32 %v1211, %v1383
        %v1387 = vld [vmem:[%s5] sm:$0x1]
        %v1389 = vperm.slane %v1387, 0
        %v1391 = vmul.f32 %v1385, %v1389
        %v1392 = vmul.f32 %v1386, %v1389
        %v1393 = vld [vmem:[%s6] sm:$0x1]
        %v1395 = vperm.slane %v1393, 0
        %v1397 = vadd.f32 %v1391, %v1395
        %v1398 = vadd.f32 %v1392, %v1395
        %v1399 = vmul.f32 %v1397, 0.5
        %v1400 = vmul.f32 %v1398, 0.5
        %v1401 = vmul.f32 %v1397, 0.044715
        %v1402 = vmul.f32 %v1398, 0.044715
        %v1403 = vmul.f32 %v1401, %v1397
        %v1404 = vmul.f32 %v1402, %v1398
        %v1405 = vmul.f32 %v1403, %v1397
        %v1406 = vmul.f32 %v1404, %v1398
        %v1407 = vadd.f32 %v1397, %v1405
        %v1408 = vadd.f32 %v1398, %v1406
        %v1409 = vmul.f32 %v1407, 0.7978846
        %v1410 = vmul.f32 %v1408, 0.7978846
        %v1411 = vtanh.pop %v1409
        %v1412 = vtanh.pop %v1410
        %v1413 = vadd.f32 %v1411, 1.0
        %v1414 = vadd.f32 %v1412, 1.0
        %v1415 = vmul.f32 %v1399, %v1413
        %v1416 = vmul.f32 %v1400, %v1414
        %1418 = vset.pattern.permute.xlu0 0
        %1419 = vperm.xlu0 %1418, %v742
        %v1420 = vpop.permute.xlu0 %1419
        %1423 = vset.pattern.permute.xlu0 0
        %1424 = vperm.xlu0 %1423, %v743
        %v1425 = vpop.permute.xlu0 %1424
        %v1427 = vmul.f32 %v1415, %v1420
        %v1428 = vmul.f32 %v1416, %v1425
        %1429 = vst [vmem:[#allocation3 + $0x8] sm:$0xff] %v1427
        %1430 = vst [vmem:[#allocation3 + $0x10] sm:$0xff] %v1428
        %v1431 = vld [vmem:[#allocation3 + $0x7] sm:$0xff]
        %v1432 = vld [vmem:[#allocation3 + $0xf] sm:$0xff]
        %v1433 = vld [vmem:[#allocation3 + $0x8] sm:$0xff]
        %v1434 = vld [vmem:[#allocation3 + $0x10] sm:$0xff]
        %v1435 = vld [vmem:[#allocation3 + $0x9] sm:$0xff]
        %v1436 = vld [vmem:[#allocation3 + $0x11] sm:$0xff]
        %v1437 = vld [vmem:[%s7] sm:$0x1]
        %v1438 = vperm.slane %v1437, 0
        %v1439 = vmul.f32 %v1431, %v1438
        %v1440 = vmul.f32 %v1432, %v1438
        %v1441 = vld [vmem:[%s7 + $0x1] sm:$0x1]
        %v1442 = vperm.slane %v1441, 0
        %v1443 = vmul.f32 %v1433, %v1442
        %v1444 = vmul.f32 %v1434, %v1442
        %v1445 = vadd.f32 %v1439, %v1443
        %v1446 = vadd.f32 %v1440, %v1444
        %v1447 = vld [vmem:[%s7 + $0x2] sm:$0x1]
        %v1448 = vperm.slane %v1447, 0
        %v1449 = vmul.f32 %v1435, %v1448
        %v1450 = vmul.f32 %v1436, %v1448
        %v1451 = vadd.f32 %v1445, %v1449
        %v1452 = vadd.f32 %v1446, %v1450
        %v1453 = vld [vmem:[%s8] sm:$0x1]
        %v1455 = vperm.slane %v1453, 0
        %v1457 = vmul.f32 %v1451, %v1455
        %v1458 = vmul.f32 %v1452, %v1455
        %v1459 = vld [vmem:[%s9] sm:$0x1]
        %v1461 = vperm.slane %v1459, 0
        %v1463 = vadd.f32 %v1457, %v1461
        %v1464 = vadd.f32 %v1458, %v1461
        %v1465 = vmul.f32 %v1463, 0.5
        %v1466 = vmul.f32 %v1464, 0.5
        %v1467 = vmul.f32 %v1463, 0.044715
        %v1468 = vmul.f32 %v1464, 0.044715
        %v1469 = vmul.f32 %v1467, %v1463
        %v1470 = vmul.f32 %v1468, %v1464
        %v1471 = vmul.f32 %v1469, %v1463
        %v1472 = vmul.f32 %v1470, %v1464
        %v1473 = vadd.f32 %v1463, %v1471
        %v1474 = vadd.f32 %v1464, %v1472
        %v1475 = vmul.f32 %v1473, 0.7978846
        %v1476 = vmul.f32 %v1474, 0.7978846
        %v1477 = vtanh.pop %v1475
        %v1478 = vtanh.pop %v1476
        %v1479 = vadd.f32 %v1477, 1.0
        %v1480 = vadd.f32 %v1478, 1.0
        %v1481 = vmul.f32 %v1465, %v1479
        %v1482 = vmul.f32 %v1466, %v1480
        %v1483 = vld [vmem:[%s10] sm:$0x1]
        %v1484 = vperm.slane %v1483, 0
        %v1485 = vmul.f32 %v1431, %v1484
        %v1486 = vmul.f32 %v1432, %v1484
        %v1487 = vld [vmem:[%s10 + $0x1] sm:$0x1]
        %v1488 = vperm.slane %v1487, 0
        %v1489 = vmul.f32 %v1433, %v1488
        %v1490 = vmul.f32 %v1434, %v1488
        %v1491 = vadd.f32 %v1485, %v1489
        %v1492 = vadd.f32 %v1486, %v1490
        %v1493 = vld [vmem:[%s10 + $0x2] sm:$0x1]
        %v1494 = vperm.slane %v1493, 0
        %v1495 = vmul.f32 %v1435, %v1494
        %v1496 = vmul.f32 %v1436, %v1494
        %v1497 = vadd.f32 %v1491, %v1495
        %v1498 = vadd.f32 %v1492, %v1496
        %v1499 = vld [vmem:[%s11] sm:$0x1]
        %v1501 = vperm.slane %v1499, 0
        %v1503 = vmul.f32 %v1497, %v1501
        %v1504 = vmul.f32 %v1498, %v1501
        %v1505 = vld [vmem:[%s12] sm:$0x1]
        %v1507 = vperm.slane %v1505, 0
        %v1509 = vadd.f32 %v1503, %v1507
        %v1510 = vadd.f32 %v1504, %v1507
        %v1511 = vmul.f32 %v1509, 0.5
        %v1512 = vmul.f32 %v1510, 0.5
        %v1513 = vmul.f32 %v1509, 0.044715
        %v1514 = vmul.f32 %v1510, 0.044715
        %v1515 = vmul.f32 %v1513, %v1509
        %v1516 = vmul.f32 %v1514, %v1510
        %v1517 = vmul.f32 %v1515, %v1509
        %v1518 = vmul.f32 %v1516, %v1510
        %v1519 = vadd.f32 %v1509, %v1517
        %v1520 = vadd.f32 %v1510, %v1518
        %v1521 = vmul.f32 %v1519, 0.7978846
        %v1522 = vmul.f32 %v1520, 0.7978846
        %v1523 = vtanh.pop %v1521
        %v1524 = vtanh.pop %v1522
        %v1525 = vadd.f32 %v1523, 1.0
        %v1526 = vadd.f32 %v1524, 1.0
        %v1527 = vmul.f32 %v1511, %v1525
        %v1528 = vmul.f32 %v1512, %v1526
        %v1529 = vpack.c.bf16 %v1528, %v1527
        %v1530 = vld [vmem:[%s13] sm:$0xf]
        %v1531 = vld [vmem:[%s13 + $0x4] sm:$0xf]
        %v1532 = vld [vmem:[%s13 + $0x8] sm:$0xf]
        %v1533 = vld [vmem:[%s13 + $0xc] sm:$0xf]
        %v1534 = vld [vmem:[%s13 + $0x10] sm:$0xf]
        %v1535 = vld [vmem:[%s13 + $0x14] sm:$0xf]
        %v1536 = vld [vmem:[%s13 + $0x18] sm:$0xf]
        %v1537 = vld [vmem:[%s13 + $0x1c] sm:$0xf]
        %v1538 = vld [vmem:[%s13 + $0x20] sm:$0xf]
        %v1539 = vld [vmem:[%s13 + $0x24] sm:$0xf]
        %v1540 = vld [vmem:[%s13 + $0x28] sm:$0xf]
        %v1541 = vld [vmem:[%s13 + $0x2c] sm:$0xf]
        %v1542 = vld [vmem:[%s13 + $0x30] sm:$0xf]
        %v1543 = vld [vmem:[%s13 + $0x34] sm:$0xf]
        %v1544 = vld [vmem:[%s13 + $0x38] sm:$0xf]
        %v1545 = vld [vmem:[%s13 + $0x3c] sm:$0xf]
        %v1562 = vunpack.c.l.b16 %v1530
        %v1563 = vunpack.c.l.b16 %v1531
        %v1564 = vunpack.c.l.b16 %v1532
        %v1565 = vunpack.c.l.b16 %v1533
        %v1566 = vunpack.c.l.b16 %v1534
        %v1567 = vunpack.c.l.b16 %v1535
        %v1568 = vunpack.c.l.b16 %v1536
        %v1569 = vunpack.c.l.b16 %v1537
        %v1570 = vunpack.c.l.b16 %v1538
        %v1571 = vunpack.c.l.b16 %v1539
        %v1572 = vunpack.c.l.b16 %v1540
        %v1573 = vunpack.c.l.b16 %v1541
        %v1574 = vunpack.c.l.b16 %v1542
        %v1575 = vunpack.c.l.b16 %v1543
        %v1576 = vunpack.c.l.b16 %v1544
        %v1577 = vunpack.c.l.b16 %v1545
        %v1578 = vpack.c.b16 %v1563, %v1562
        %v1579 = vpack.c.b16 %v1565, %v1564
        %v1580 = vpack.c.b16 %v1567, %v1566
        %v1581 = vpack.c.b16 %v1569, %v1568
        %v1582 = vpack.c.b16 %v1571, %v1570
        %v1583 = vpack.c.b16 %v1573, %v1572
        %v1584 = vpack.c.b16 %v1575, %v1574
        %v1585 = vpack.c.b16 %v1577, %v1576
        %1594 = vmatpush.bf16.msra.mxu0 %v1585
        %1595 = vmatpush.bf16.msra.mxu0 %v1584
        %1596 = vmatpush.bf16.msra.mxu0 %v1583
        %1597 = vmatpush.bf16.msra.mxu0 %v1582
        %1598 = vmatpush.bf16.msra.mxu0 %v1581
        %1599 = vmatpush.bf16.msra.mxu0 %v1580
        %1600 = vmatpush.bf16.msra.mxu0 %v1579
        %1601 = vmatpush.bf16.msra.mxu0 %v1578
        %1602 = vmatmul.bf16.gmra.mxu0 %v1529
        %v1603 = vpop.f32.mrf.mxu0
        %v1604 = vadd.f32 0.0, %v1603
        %v1605 = vpop.f32.mrf.mxu0
        %v1606 = vadd.f32 0.0, %v1605
        %1607 = vdwg.mxu0
        %v1608 = vld [vmem:[%s14] sm:$0x1]
        %v1610 = vperm.slane %v1608, 0
        %v1612 = vmul.f32 %v1604, %v1610
        %v1613 = vmul.f32 %v1606, %v1610
        %v1614 = vld [vmem:[%s15] sm:$0x1]
        %v1616 = vperm.slane %v1614, 0
        %v1618 = vadd.f32 %v1612, %v1616
        %v1619 = vadd.f32 %v1613, %v1616
        %v1620 = vmul.f32 %v1618, 0.5
        %v1621 = vmul.f32 %v1619, 0.5
        %v1622 = vmul.f32 %v1618, 0.044715
        %v1623 = vmul.f32 %v1619, 0.044715
        %v1624 = vmul.f32 %v1622, %v1618
        %v1625 = vmul.f32 %v1623, %v1619
        %v1626 = vmul.f32 %v1624, %v1618
        %v1627 = vmul.f32 %v1625, %v1619
        %v1628 = vadd.f32 %v1618, %v1626
        %v1629 = vadd.f32 %v1619, %v1627
        %v1630 = vmul.f32 %v1628, 0.7978846
        %v1631 = vmul.f32 %v1629, 0.7978846
        %v1632 = vtanh.pop %v1630
        %v1633 = vtanh.pop %v1631
        %v1634 = vadd.f32 %v1632, 1.0
        %v1635 = vadd.f32 %v1633, 1.0
        %v1636 = vmul.f32 %v1620, %v1634
        %v1637 = vmul.f32 %v1621, %v1635
        %v1638 = vpack.c.bf16 %v1481, %v1481
        %v1639 = vpack.c.bf16 %v1482, %v1482
        %1640 = vst [vmem:[#allocation5] sm:$0xf] %v1638
        %1641 = vst [vmem:[#allocation5 + $0x8] sm:$0xf] %v1639
        %v1642 = vpack.c.bf16 %v1636, %v1636
        %v1643 = vpack.c.bf16 %v1637, %v1637
        %1644 = vst [vmem:[#allocation5 + $0x4] sm:$0xf] %v1642
        %1645 = vst [vmem:[#allocation5 + $0xc] sm:$0xf] %v1643
        %v1646 = vld [vmem:[%s17] sm:$0x1]
        %v1647 = vld [vmem:[#allocation5] sm:$0xff]
        %v1648 = vld [vmem:[#allocation5 + $0x8] sm:$0xff]
        %v1651 = vunpack.c.l.b16 %v1647
        %v1652 = vunpack.c.h.b16 %v1647
        %v1653 = vunpack.c.l.b16 %v1648
        %v1654 = vunpack.c.h.b16 %v1648
        %v1655 = vpack.c.b16 %v1653, %v1651
        %v1656 = vpack.c.b16 %v1654, %v1652
        %vm1659 = vcmask 130048
        %v1661 = vsel %vm1659, %v1646, 0
        %1663 = vmatpush.bf16.msra.mxu0 0
        %1664 = vmatpush.bf16.msra.mxu0 0
        %1665 = vmatpush.bf16.msra.mxu0 0
        %1666 = vmatpush.bf16.msra.mxu0 0
        %1667 = vmatpush.bf16.msra.mxu0 0
        %1668 = vmatpush.bf16.msra.mxu0 0
        %1669 = vmatpush.bf16.msra.mxu0 0
        %1670 = vmatpush.bf16.msra.mxu0 %v1655
        %1671 = vmatmul.bf16.gmra.mxu0 %v1661
        %v1672 = vpop.f32.mrf.mxu0
        %v1673 = vadd.f32 0.0, %v1672
        %v1674 = vpop.f32.mrf.mxu0
        %1675 = vdwg.mxu0
        %1676 = vmatpush.bf16.msra.mxu0 0
        %1677 = vmatpush.bf16.msra.mxu0 0
        %1678 = vmatpush.bf16.msra.mxu0 0
        %1679 = vmatpush.bf16.msra.mxu0 0
        %1680 = vmatpush.bf16.msra.mxu0 0
        %1681 = vmatpush.bf16.msra.mxu0 0
        %1682 = vmatpush.bf16.msra.mxu0 0
        %1683 = vmatpush.bf16.msra.mxu0 %v1656
        %1684 = vmatmul.bf16.gmra.mxu0 %v1661
        %v1685 = vpop.f32.mrf.mxu0
        %v1686 = vadd.f32 0.0, %v1685
        %v1687 = vpop.f32.mrf.mxu0
        %1688 = vdwg.mxu0
        %v1689 = vpack.c.bf16 %v1673, %v1673
        %v1690 = vpack.c.bf16 %v1686, %v1686
        %v1691 = vld [vmem:[#allocation8] sm:$0xff]
        %v1692 = vld [vmem:[#allocation8 + $0x8] sm:$0xff]
        %v1693 = vld [vmem:[#allocation8 + $0x10] sm:$0xff]
        %v1694 = vld [vmem:[#allocation8 + $0x18] sm:$0xff]
        %v1695 = vld [vmem:[#allocation8 + $0x20] sm:$0xff]
        %v1696 = vld [vmem:[#allocation8 + $0x28] sm:$0xff]
        %v1697 = vld [vmem:[#allocation8 + $0x30] sm:$0xff]
        %v1698 = vld [vmem:[#allocation8 + $0x38] sm:$0xff]
        %v1699 = vld [vmem:[#allocation8 + $0x40] sm:$0xff]
        %v1700 = vld [vmem:[#allocation8 + $0x48] sm:$0xff]
        %v1701 = vld [vmem:[#allocation8 + $0x50] sm:$0xff]
        %v1702 = vld [vmem:[#allocation8 + $0x58] sm:$0xff]
        %v1703 = vld [vmem:[#allocation8 + $0x60] sm:$0xff]
        %v1704 = vld [vmem:[#allocation8 + $0x68] sm:$0xff]
        %v1705 = vld [vmem:[#allocation8 + $0x70] sm:$0xff]
        %v1706 = vld [vmem:[#allocation8 + $0x78] sm:$0xff]
        %v1707 = vld [vmem:[#allocation8 + $0x80] sm:$0xff]
        %v1708 = vld [vmem:[#allocation8 + $0x88] sm:$0xff]
        %v1709 = vld [vmem:[#allocation8 + $0x90] sm:$0xff]
        %v1710 = vld [vmem:[#allocation8 + $0x98] sm:$0xff]
        %v1711 = vld [vmem:[#allocation8 + $0xa0] sm:$0xff]
        %v1712 = vld [vmem:[#allocation8 + $0xa8] sm:$0xff]
        %v1713 = vld [vmem:[#allocation8 + $0xb0] sm:$0xff]
        %v1714 = vld [vmem:[#allocation8 + $0xb8] sm:$0xff]
        %v1715 = vld [vmem:[#allocation8 + $0xc0] sm:$0xff]
        %v1716 = vld [vmem:[#allocation8 + $0xc8] sm:$0xff]
        %v1717 = vld [vmem:[#allocation8 + $0xd0] sm:$0xff]
        %v1718 = vld [vmem:[#allocation8 + $0xd8] sm:$0xff]
        %v1719 = vld [vmem:[#allocation8 + $0xe0] sm:$0xff]
        %v1720 = vld [vmem:[#allocation8 + $0xe8] sm:$0xff]
        %v1721 = vld [vmem:[#allocation8 + $0xf0] sm:$0xff]
        %v1722 = vld [vmem:[#allocation8 + $0xf8] sm:$0xff]
        %v1755 = vunpack.c.l.b16 %v1691
        %v1756 = vunpack.c.h.b16 %v1691
        %v1757 = vunpack.c.l.b16 %v1692
        %v1758 = vunpack.c.h.b16 %v1692
        %v1759 = vunpack.c.l.b16 %v1693
        %v1760 = vunpack.c.h.b16 %v1693
        %v1761 = vunpack.c.l.b16 %v1694
        %v1762 = vunpack.c.h.b16 %v1694
        %v1763 = vunpack.c.l.b16 %v1695
        %v1764 = vunpack.c.h.b16 %v1695
        %v1765 = vunpack.c.l.b16 %v1696
        %v1766 = vunpack.c.h.b16 %v1696
        %v1767 = vunpack.c.l.b16 %v1697
        %v1768 = vunpack.c.h.b16 %v1697
        %v1769 = vunpack.c.l.b16 %v1698
        %v1770 = vunpack.c.h.b16 %v1698
        %v1771 = vunpack.c.l.b16 %v1699
        %v1772 = vunpack.c.h.b16 %v1699
        %v1773 = vunpack.c.l.b16 %v1700
        %v1774 = vunpack.c.h.b16 %v1700
        %v1775 = vunpack.c.l.b16 %v1701
        %v1776 = vunpack.c.h.b16 %v1701
        %v1777 = vunpack.c.l.b16 %v1702
        %v1778 = vunpack.c.h.b16 %v1702
        %v1779 = vunpack.c.l.b16 %v1703
        %v1780 = vunpack.c.h.b16 %v1703
        %v1781 = vunpack.c.l.b16 %v1704
        %v1782 = vunpack.c.h.b16 %v1704
        %v1783 = vunpack.c.l.b16 %v1705
        %v1784 = vunpack.c.h.b16 %v1705
        %v1785 = vunpack.c.l.b16 %v1706
        %v1786 = vunpack.c.h.b16 %v1706
        %v1787 = vunpack.c.l.b16 %v1707
        %v1788 = vunpack.c.h.b16 %v1707
        %v1789 = vunpack.c.l.b16 %v1708
        %v1790 = vunpack.c.h.b16 %v1708
        %v1791 = vunpack.c.l.b16 %v1709
        %v1792 = vunpack.c.h.b16 %v1709
        %v1793 = vunpack.c.l.b16 %v1710
        %v1794 = vunpack.c.h.b16 %v1710
        %v1795 = vunpack.c.l.b16 %v1711
        %v1796 = vunpack.c.h.b16 %v1711
        %v1797 = vunpack.c.l.b16 %v1712
        %v1798 = vunpack.c.h.b16 %v1712
        %v1799 = vunpack.c.l.b16 %v1713
        %v1800 = vunpack.c.h.b16 %v1713
        %v1801 = vunpack.c.l.b16 %v1714
        %v1802 = vunpack.c.h.b16 %v1714
        %v1803 = vunpack.c.l.b16 %v1715
        %v1804 = vunpack.c.h.b16 %v1715
        %v1805 = vunpack.c.l.b16 %v1716
        %v1806 = vunpack.c.h.b16 %v1716
        %v1807 = vunpack.c.l.b16 %v1717
        %v1808 = vunpack.c.h.b16 %v1717
        %v1809 = vunpack.c.l.b16 %v1718
        %v1810 = vunpack.c.h.b16 %v1718
        %v1811 = vunpack.c.l.b16 %v1719
        %v1812 = vunpack.c.h.b16 %v1719
        %v1813 = vunpack.c.l.b16 %v1720
        %v1814 = vunpack.c.h.b16 %v1720
        %v1815 = vunpack.c.l.b16 %v1721
        %v1816 = vunpack.c.h.b16 %v1721
        %v1817 = vunpack.c.l.b16 %v1722
        %v1818 = vunpack.c.h.b16 %v1722
        %v1819 = vpack.c.b16 %v1757, %v1755
        %v1820 = vpack.c.b16 %v1758, %v1756
        %v1821 = vpack.c.b16 %v1761, %v1759
        %v1822 = vpack.c.b16 %v1762, %v1760
        %v1823 = vpack.c.b16 %v1765, %v1763
        %v1824 = vpack.c.b16 %v1766, %v1764
        %v1825 = vpack.c.b16 %v1769, %v1767
        %v1826 = vpack.c.b16 %v1770, %v1768
        %v1827 = vpack.c.b16 %v1773, %v1771
        %v1828 = vpack.c.b16 %v1774, %v1772
        %v1829 = vpack.c.b16 %v1777, %v1775
        %v1830 = vpack.c.b16 %v1778, %v1776
        %v1831 = vpack.c.b16 %v1781, %v1779
        %v1832 = vpack.c.b16 %v1782, %v1780
        %v1833 = vpack.c.b16 %v1785, %v1783
        %v1834 = vpack.c.b16 %v1786, %v1784
        %v1835 = vpack.c.b16 %v1789, %v1787
        %v1836 = vpack.c.b16 %v1790, %v1788
        %v1837 = vpack.c.b16 %v1793, %v1791
        %v1838 = vpack.c.b16 %v1794, %v1792
        %v1839 = vpack.c.b16 %v1797, %v1795
        %v1840 = vpack.c.b16 %v1798, %v1796
        %v1841 = vpack.c.b16 %v1801, %v1799
        %v1842 = vpack.c.b16 %v1802, %v1800
        %v1843 = vpack.c.b16 %v1805, %v1803
        %v1844 = vpack.c.b16 %v1806, %v1804
        %v1845 = vpack.c.b16 %v1809, %v1807
        %v1846 = vpack.c.b16 %v1810, %v1808
        %v1847 = vpack.c.b16 %v1813, %v1811
        %v1848 = vpack.c.b16 %v1814, %v1812
        %v1849 = vpack.c.b16 %v1817, %v1815
        %v1850 = vpack.c.b16 %v1818, %v1816
        %1883 = vmatpush.bf16.msra.mxu0 %v1833
        %1884 = vmatpush.bf16.msra.mxu0 %v1831
        %1885 = vmatpush.bf16.msra.mxu0 %v1829
        %1886 = vmatpush.bf16.msra.mxu0 %v1827
        %1887 = vmatpush.bf16.msra.mxu0 %v1825
        %1888 = vmatpush.bf16.msra.mxu0 %v1823
        %1889 = vmatpush.bf16.msra.mxu0 %v1821
        %1890 = vmatpush.bf16.msra.mxu0 %v1819
        %1891 = vmatmul.bf16.gmra.mxu0 %v1689
        %v1892 = vpop.f32.mrf.mxu0
        %v1893 = vadd.f32 0.0, %v1892
        %v1894 = vpop.f32.mrf.mxu0
        %1895 = vdwg.mxu0
        %1896 = vmatpush.bf16.msra.mxu0 %v1849
        %1897 = vmatpush.bf16.msra.mxu0 %v1847
        %1898 = vmatpush.bf16.msra.mxu0 %v1845
        %1899 = vmatpush.bf16.msra.mxu0 %v1843
        %1900 = vmatpush.bf16.msra.mxu0 %v1841
        %1901 = vmatpush.bf16.msra.mxu0 %v1839
        %1902 = vmatpush.bf16.msra.mxu0 %v1837
        %1903 = vmatpush.bf16.msra.mxu0 %v1835
        %1904 = vmatmul.bf16.gmra.mxu0 %v1690
        %v1905 = vpop.f32.mrf.mxu0
        %v1906 = vadd.f32 %v1893, %v1905
        %v1907 = vpop.f32.mrf.mxu0
        %1908 = vdwg.mxu0
        %1909 = vmatpush.bf16.msra.mxu0 %v1834
        %1910 = vmatpush.bf16.msra.mxu0 %v1832
        %1911 = vmatpush.bf16.msra.mxu0 %v1830
        %1912 = vmatpush.bf16.msra.mxu0 %v1828
        %1913 = vmatpush.bf16.msra.mxu0 %v1826
        %1914 = vmatpush.bf16.msra.mxu0 %v1824
        %1915 = vmatpush.bf16.msra.mxu0 %v1822
        %1916 = vmatpush.bf16.msra.mxu0 %v1820
        %1917 = vmatmul.bf16.gmra.mxu0 %v1689
        %v1918 = vpop.f32.mrf.mxu0
        %v1919 = vadd.f32 0.0, %v1918
        %v1920 = vpop.f32.mrf.mxu0
        %1921 = vdwg.mxu0
        %1922 = vmatpush.bf16.msra.mxu0 %v1850
        %1923 = vmatpush.bf16.msra.mxu0 %v1848
        %1924 = vmatpush.bf16.msra.mxu0 %v1846
        %1925 = vmatpush.bf16.msra.mxu0 %v1844
        %1926 = vmatpush.bf16.msra.mxu0 %v1842
        %1927 = vmatpush.bf16.msra.mxu0 %v1840
        %1928 = vmatpush.bf16.msra.mxu0 %v1838
        %1929 = vmatpush.bf16.msra.mxu0 %v1836
        %1930 = vmatmul.bf16.gmra.mxu0 %v1690
        %v1931 = vpop.f32.mrf.mxu0
        %v1932 = vadd.f32 %v1919, %v1931
        %v1933 = vpop.f32.mrf.mxu0
        %1934 = vdwg.mxu0
        %v1935 = vsub.f32 0.0, %v1906
        %v1936 = vsub.f32 0.0, %v1932
        %v1937 = vmul.f32 %v1935, 1.442695
        %v1938 = vpow.pop %v1937
        %v1939 = vmul.f32 %v1936, 1.442695
        %v1940 = vpow.pop %v1939
        %v1941 = vadd.f32 %v1938, 1.0
        %v1942 = vadd.f32 %v1940, 1.0
        %v1943 = vrcp.pop %v1941
        %v1944 = vmul.f32 %v1941, %v1943
        %v1945 = vsub.f32 1.0, %v1944
        %v1946 = vmul.f32 %v1943, %v1945
        %v1947 = vadd.f32 %v1943, %v1946
        %vm1948 = vweird.f32 %v1941
        %vm1949 = vweird.f32 %v1943
        %vm1950 = vmor %vm1948, %vm1949
        %v1951 = vsel %vm1950, %v1943, %v1947
        %v1952 = vand.u32 2147483647, %v1941
        %vm1953 = vcmp.eq.f32.partialorder %v1952, 8.507059e+37
        %v1954 = vand.u32 %v1941, 2147483648
        %v1955 = vor.u32 1.1754944e-38, %v1954
        %v1956 = vsel %vm1953, %v1955, %v1951
        %v1957 = vmul.f32 1.0, %v1956
        %v1958 = vrcp.pop %v1942
        %v1959 = vmul.f32 %v1942, %v1958
        %v1960 = vsub.f32 1.0, %v1959
        %v1961 = vmul.f32 %v1958, %v1960
        %v1962 = vadd.f32 %v1958, %v1961
        %vm1963 = vweird.f32 %v1942
        %vm1964 = vweird.f32 %v1958
        %vm1965 = vmor %vm1963, %vm1964
        %v1966 = vsel %vm1965, %v1958, %v1962
        %v1967 = vand.u32 2147483647, %v1942
        %vm1968 = vcmp.eq.f32.partialorder %v1967, 8.507059e+37
        %v1969 = vand.u32 %v1942, 2147483648
        %v1970 = vor.u32 1.1754944e-38, %v1969
        %v1971 = vsel %vm1968, %v1970, %v1966
        %v1972 = vmul.f32 1.0, %v1971
        %v1973 = vpack.c.bf16 %v1972, %v1957
        %v1974 = vunpack.c.l.bf16 %v1973
        %v1975 = vunpack.c.h.bf16 %v1973
        %v1976 = vperm.slane %v1974, 0
        %v1977 = vmul.f32 %v1481, %v1976
        %v1978 = vmul.f32 %v1482, %v1976
        %v1979 = vperm.slane %v1975, 0
        %v1980 = vmul.f32 %v1636, %v1979
        %v1981 = vmul.f32 %v1637, %v1979
        %v1982 = vadd.f32 %v1977, %v1980
        %v1983 = vadd.f32 %v1978, %v1981
        %v1984 = vld [vmem:[%s19] sm:$0x1]
        %v1986 = vperm.slane %v1984, 0
        %v1988 = vmul.f32 %v1982, %v1986
        %v1989 = vmul.f32 %v1983, %v1986
        %v1990 = vld [vmem:[%s20] sm:$0x1]
        %v1992 = vperm.slane %v1990, 0
        %v1994 = vadd.f32 %v1988, %v1992
        %v1995 = vadd.f32 %v1989, %v1992
        %v1996 = vmul.f32 %v1994, 0.5
        %v1997 = vmul.f32 %v1995, 0.5
        %v1998 = vmul.f32 %v1994, 0.044715
        %v1999 = vmul.f32 %v1995, 0.044715
        %v2000 = vmul.f32 %v1998, %v1994
        %v2001 = vmul.f32 %v1999, %v1995
        %v2002 = vmul.f32 %v2000, %v1994
        %v2003 = vmul.f32 %v2001, %v1995
        %v2004 = vadd.f32 %v1994, %v2002
        %v2005 = vadd.f32 %v1995, %v2003
        %v2006 = vmul.f32 %v2004, 0.7978846
        %v2007 = vmul.f32 %v2005, 0.7978846
        %v2008 = vtanh.pop %v2006
        %v2009 = vtanh.pop %v2007
        %v2010 = vadd.f32 %v2008, 1.0
        %v2011 = vadd.f32 %v2009, 1.0
        %v2012 = vmul.f32 %v1996, %v2010
        %v2013 = vmul.f32 %v1997, %v2011
        %v2014 = vmul.f32 %v2012, %v1420
        %v2015 = vmul.f32 %v2013, %v1425
        %v2016 = vpack.c.bf16 %v2014, %v2014
        %v2017 = vpack.c.bf16 %v2015, %v2015
        %2018 = vst [vmem:[#allocation4 + $0x4] sm:$0xf] %v2016
        %2019 = vst [vmem:[#allocation4 + $0x8] sm:$0xf] %v2017
        %v2020 = vld [vmem:[#allocation4] sm:$0x8]
        %v2021 = vld [vmem:[#allocation4 + $0x4] sm:$0xf]
        %v2022 = vld [vmem:[#allocation4 + $0x8] sm:$0xf]
        %v2023 = vld [vmem:[#allocation10] sm:$0xff]
        %v2024 = vld [vmem:[#allocation10 + $0x8] sm:$0xff]
        %v2025 = vld [vmem:[#allocation10 + $0x10] sm:$0xff]
        %v2026 = vld [vmem:[#allocation10 + $0x18] sm:$0xff]
        %v2027 = vld [vmem:[#allocation10 + $0x20] sm:$0xff]
        %v2028 = vld [vmem:[#allocation10 + $0x28] sm:$0xff]
        %v2029 = vld [vmem:[#allocation10 + $0x30] sm:$0xff]
        %v2030 = vld [vmem:[#allocation10 + $0x38] sm:$0xff]
        %v2031 = vld [vmem:[#allocation10 + $0x40] sm:$0xff]
        %v2032 = vld [vmem:[#allocation10 + $0x48] sm:$0xff]
        %v2033 = vld [vmem:[#allocation10 + $0x50] sm:$0xff]
        %v2034 = vld [vmem:[#allocation10 + $0x58] sm:$0xff]
        %v2035 = vld [vmem:[#allocation10 + $0x60] sm:$0xff]
        %v2036 = vld [vmem:[#allocation10 + $0x68] sm:$0xff]
        %v2037 = vld [vmem:[#allocation10 + $0x70] sm:$0xff]
        %v2038 = vld [vmem:[#allocation10 + $0x78] sm:$0xff]
        %s2039 = scalar_lea.vmem [#allocation10], 128
        %v2040 = vld [vmem:[%s2039] sm:$0xff]
        %v2041 = vld [vmem:[%s2039 + $0x8] sm:$0xff]
        %v2042 = vld [vmem:[%s2039 + $0x10] sm:$0xff]
        %v2043 = vld [vmem:[%s2039 + $0x18] sm:$0xff]
        %v2044 = vld [vmem:[%s2039 + $0x20] sm:$0xff]
        %v2045 = vld [vmem:[%s2039 + $0x28] sm:$0xff]
        %v2046 = vld [vmem:[%s2039 + $0x30] sm:$0xff]
        %v2047 = vld [vmem:[%s2039 + $0x38] sm:$0xff]
        %v2048 = vld [vmem:[%s2039 + $0x40] sm:$0xff]
        %v2049 = vld [vmem:[%s2039 + $0x48] sm:$0xff]
        %v2050 = vld [vmem:[%s2039 + $0x50] sm:$0xff]
        %v2051 = vld [vmem:[%s2039 + $0x58] sm:$0xff]
        %v2052 = vld [vmem:[%s2039 + $0x60] sm:$0xff]
        %v2053 = vld [vmem:[%s2039 + $0x68] sm:$0xff]
        %v2054 = vld [vmem:[%s2039 + $0x70] sm:$0xff]
        %v2055 = vld [vmem:[%s2039 + $0x78] sm:$0xff]
        %v2058 = vunpack.c.l.b16 %v2021
        %v2059 = vunpack.c.l.b16 %v2022
        %v2060 = vpack.c.b16 %v2059, %v2058
        %v2078 = vunpack.c.l.b16 %v2040
        %v2079 = vunpack.c.h.b16 %v2040
        %v2080 = vunpack.c.l.b16 %v2041
        %v2081 = vunpack.c.h.b16 %v2041
        %v2082 = vunpack.c.l.b16 %v2042
        %v2083 = vunpack.c.h.b16 %v2042
        %v2084 = vunpack.c.l.b16 %v2043
        %v2085 = vunpack.c.h.b16 %v2043
        %v2086 = vunpack.c.l.b16 %v2044
        %v2087 = vunpack.c.h.b16 %v2044
        %v2088 = vunpack.c.l.b16 %v2045
        %v2089 = vunpack.c.h.b16 %v2045
        %v2090 = vunpack.c.l.b16 %v2046
        %v2091 = vunpack.c.h.b16 %v2046
        %v2092 = vunpack.c.l.b16 %v2047
        %v2093 = vunpack.c.h.b16 %v2047
        %v2094 = vunpack.c.l.b16 %v2048
        %v2095 = vunpack.c.h.b16 %v2048
        %v2096 = vunpack.c.l.b16 %v2049
        %v2097 = vunpack.c.h.b16 %v2049
        %v2098 = vunpack.c.l.b16 %v2050
        %v2099 = vunpack.c.h.b16 %v2050
        %v2100 = vunpack.c.l.b16 %v2051
        %v2101 = vunpack.c.h.b16 %v2051
        %v2102 = vunpack.c.l.b16 %v2052
        %v2103 = vunpack.c.h.b16 %v2052
        %v2104 = vunpack.c.l.b16 %v2053
        %v2105 = vunpack.c.h.b16 %v2053
        %v2106 = vunpack.c.l.b16 %v2054
        %v2107 = vunpack.c.h.b16 %v2054
        %v2108 = vunpack.c.l.b16 %v2055
        %v2109 = vunpack.c.h.b16 %v2055
        %v2110 = vpack.c.b16 %v2080, %v2078
        %v2111 = vpack.c.b16 %v2081, %v2079
        %v2112 = vpack.c.b16 %v2084, %v2082
        %v2113 = vpack.c.b16 %v2085, %v2083
        %v2114 = vpack.c.b16 %v2088, %v2086
        %v2115 = vpack.c.b16 %v2089, %v2087
        %v2116 = vpack.c.b16 %v2092, %v2090
        %v2117 = vpack.c.b16 %v2093, %v2091
        %v2118 = vpack.c.b16 %v2096, %v2094
        %v2119 = vpack.c.b16 %v2097, %v2095
        %v2120 = vpack.c.b16 %v2100, %v2098
        %v2121 = vpack.c.b16 %v2101, %v2099
        %v2122 = vpack.c.b16 %v2104, %v2102
        %v2123 = vpack.c.b16 %v2105, %v2103
        %v2124 = vpack.c.b16 %v2108, %v2106
        %v2125 = vpack.c.b16 %v2109, %v2107
        %2142 = vmatpush.bf16.msra.mxu0 %v2124
        %2143 = vmatpush.bf16.msra.mxu0 %v2122
        %2144 = vmatpush.bf16.msra.mxu0 %v2120
        %2145 = vmatpush.bf16.msra.mxu0 %v2118
        %2146 = vmatpush.bf16.msra.mxu0 %v2116
        %2147 = vmatpush.bf16.msra.mxu0 %v2114
        %2148 = vmatpush.bf16.msra.mxu0 %v2112
        %2149 = vmatpush.bf16.msra.mxu0 %v2110
        %2150 = vmatmul.bf16.gmra.mxu0 %v2060
        %v2151 = vpop.f32.mrf.mxu0
        %v2152 = vadd.f32 0.0, %v2151
        %v2153 = vpop.f32.mrf.mxu0
        %v2154 = vadd.f32 0.0, %v2153
        %2155 = vdwg.mxu0
        %2156 = vmatpush.bf16.msra.mxu0 %v2125
        %2157 = vmatpush.bf16.msra.mxu0 %v2123
        %2158 = vmatpush.bf16.msra.mxu0 %v2121
        %2159 = vmatpush.bf16.msra.mxu0 %v2119
        %2160 = vmatpush.bf16.msra.mxu0 %v2117
        %2161 = vmatpush.bf16.msra.mxu0 %v2115
        %2162 = vmatpush.bf16.msra.mxu0 %v2113
        %2163 = vmatpush.bf16.msra.mxu0 %v2111
        %2164 = vmatmul.bf16.gmra.mxu0 %v2060
        %v2165 = vpop.f32.mrf.mxu0
        %v2166 = vadd.f32 0.0, %v2165
        %v2167 = vpop.f32.mrf.mxu0
        %v2168 = vadd.f32 0.0, %v2167
        %2169 = vdwg.mxu0
        %v2171 = vunpack.c.l.b16 %v2020
        %v2172 = vpack.c.b16 %v2058, %v2171
        %v2173 = vpack.c.b16 %v2059, %v2059
        %vm2174 = vsmask.f32 4352
        %v2176 = vshrl.u32 %v2172, 16
        %v2178 = vrot.slane %v2176, 3
        %v2179 = vshll.u32 %v2172, 16
        %v2181 = vrot.slane %v2179, 4
        %v2182 = vor.u32 %v2178, %v2181
        %v2184 = vshrl.u32 %v2173, 16
        %v2186 = vrot.slane %v2184, 3
        %v2187 = vshll.u32 %v2173, 16
        %v2189 = vrot.slane %v2187, 4
        %v2190 = vor.u32 %v2186, %v2189
        %v2191 = vsel %vm2174, %v2182, %v2190
        %v2209 = vunpack.c.l.b16 %v2023
        %v2210 = vunpack.c.h.b16 %v2023
        %v2211 = vunpack.c.l.b16 %v2024
        %v2212 = vunpack.c.h.b16 %v2024
        %v2213 = vunpack.c.l.b16 %v2025
        %v2214 = vunpack.c.h.b16 %v2025
        %v2215 = vunpack.c.l.b16 %v2026
        %v2216 = vunpack.c.h.b16 %v2026
        %v2217 = vunpack.c.l.b16 %v2027
        %v2218 = vunpack.c.h.b16 %v2027
        %v2219 = vunpack.c.l.b16 %v2028
        %v2220 = vunpack.c.h.b16 %v2028
        %v2221 = vunpack.c.l.b16 %v2029
        %v2222 = vunpack.c.h.b16 %v2029
        %v2223 = vunpack.c.l.b16 %v2030
        %v2224 = vunpack.c.h.b16 %v2030
        %v2225 = vunpack.c.l.b16 %v2031
        %v2226 = vunpack.c.h.b16 %v2031
        %v2227 = vunpack.c.l.b16 %v2032
        %v2228 = vunpack.c.h.b16 %v2032
        %v2229 = vunpack.c.l.b16 %v2033
        %v2230 = vunpack.c.h.b16 %v2033
        %v2231 = vunpack.c.l.b16 %v2034
        %v2232 = vunpack.c.h.b16 %v2034
        %v2233 = vunpack.c.l.b16 %v2035
        %v2234 = vunpack.c.h.b16 %v2035
        %v2235 = vunpack.c.l.b16 %v2036
        %v2236 = vunpack.c.h.b16 %v2036
        %v2237 = vunpack.c.l.b16 %v2037
        %v2238 = vunpack.c.h.b16 %v2037
        %v2239 = vunpack.c.l.b16 %v2038
        %v2240 = vunpack.c.h.b16 %v2038
        %v2241 = vpack.c.b16 %v2211, %v2209
        %v2242 = vpack.c.b16 %v2212, %v2210
        %v2243 = vpack.c.b16 %v2215, %v2213
        %v2244 = vpack.c.b16 %v2216, %v2214
        %v2245 = vpack.c.b16 %v2219, %v2217
        %v2246 = vpack.c.b16 %v2220, %v2218
        %v2247 = vpack.c.b16 %v2223, %v2221
        %v2248 = vpack.c.b16 %v2224, %v2222
        %v2249 = vpack.c.b16 %v2227, %v2225
        %v2250 = vpack.c.b16 %v2228, %v2226
        %v2251 = vpack.c.b16 %v2231, %v2229
        %v2252 = vpack.c.b16 %v2232, %v2230
        %v2253 = vpack.c.b16 %v2235, %v2233
        %v2254 = vpack.c.b16 %v2236, %v2234
        %v2255 = vpack.c.b16 %v2239, %v2237
        %v2256 = vpack.c.b16 %v2240, %v2238
        %2273 = vmatpush.bf16.msra.mxu0 %v2255
        %2274 = vmatpush.bf16.msra.mxu0 %v2253
        %2275 = vmatpush.bf16.msra.mxu0 %v2251
        %2276 = vmatpush.bf16.msra.mxu0 %v2249
        %2277 = vmatpush.bf16.msra.mxu0 %v2247
        %2278 = vmatpush.bf16.msra.mxu0 %v2245
        %2279 = vmatpush.bf16.msra.mxu0 %v2243
        %2280 = vmatpush.bf16.msra.mxu0 %v2241
        %2281 = vmatmul.bf16.gmra.mxu0 %v2191
        %v2282 = vpop.f32.mrf.mxu0
        %v2283 = vadd.f32 %v2152, %v2282
        %v2284 = vpop.f32.mrf.mxu0
        %v2285 = vadd.f32 %v2154, %v2284
        %2286 = vdwg.mxu0
        %2287 = vmatpush.bf16.msra.mxu0 %v2256
        %2288 = vmatpush.bf16.msra.mxu0 %v2254
        %2289 = vmatpush.bf16.msra.mxu0 %v2252
        %2290 = vmatpush.bf16.msra.mxu0 %v2250
        %2291 = vmatpush.bf16.msra.mxu0 %v2248
        %2292 = vmatpush.bf16.msra.mxu0 %v2246
        %2293 = vmatpush.bf16.msra.mxu0 %v2244
        %2294 = vmatpush.bf16.msra.mxu0 %v2242
        %2295 = vmatmul.bf16.gmra.mxu0 %v2191
        %v2296 = vpop.f32.mrf.mxu0
        %v2297 = vadd.f32 %v2166, %v2296
        %v2298 = vpop.f32.mrf.mxu0
        %v2299 = vadd.f32 %v2168, %v2298
        %2300 = vdwg.mxu0
        %v2301 = vld [vmem:[#allocation4 + $0x4] sm:$0xf]
        %v2302 = vld [vmem:[#allocation4 + $0x8] sm:$0xf]
        %v2303 = vld [vmem:[#allocation4 + $0xc] sm:$0x1]
        %s2304 = scalar_lea.vmem [#allocation10], 256
        %v2305 = vld [vmem:[%s2304] sm:$0xff]
        %v2306 = vld [vmem:[%s2304 + $0x8] sm:$0xff]
        %v2307 = vld [vmem:[%s2304 + $0x10] sm:$0xff]
        %v2308 = vld [vmem:[%s2304 + $0x18] sm:$0xff]
        %v2309 = vld [vmem:[%s2304 + $0x20] sm:$0xff]
        %v2310 = vld [vmem:[%s2304 + $0x28] sm:$0xff]
        %v2311 = vld [vmem:[%s2304 + $0x30] sm:$0xff]
        %v2312 = vld [vmem:[%s2304 + $0x38] sm:$0xff]
        %v2313 = vld [vmem:[%s2304 + $0x40] sm:$0xff]
        %v2314 = vld [vmem:[%s2304 + $0x48] sm:$0xff]
        %v2315 = vld [vmem:[%s2304 + $0x50] sm:$0xff]
        %v2316 = vld [vmem:[%s2304 + $0x58] sm:$0xff]
        %v2317 = vld [vmem:[%s2304 + $0x60] sm:$0xff]
        %v2318 = vld [vmem:[%s2304 + $0x68] sm:$0xff]
        %v2319 = vld [vmem:[%s2304 + $0x70] sm:$0xff]
        %v2320 = vld [vmem:[%s2304 + $0x78] sm:$0xff]
        %v2324 = vunpack.c.l.b16 %v2301
        %v2325 = vunpack.c.l.b16 %v2302
        %v2326 = vunpack.c.l.b16 %v2303
        %v2327 = vpack.c.b16 %v2325, %v2324
        %v2328 = vpack.c.b16 %v2326, %v2326
        %v2330 = vshrl.u32 %v2327, 16
        %v2332 = vshll.u32 %v2327, 16
        %v2334 = vrot.slane %v2332, 1
        %v2335 = vor.u32 %v2330, %v2334
        %v2337 = vshll.u32 %v2328, 16
        %v2339 = vrot.slane %v2337, 1
        %v2340 = vsel %vm936, %v2335, %v2339
        %v2358 = vunpack.c.l.b16 %v2305
        %v2359 = vunpack.c.h.b16 %v2305
        %v2360 = vunpack.c.l.b16 %v2306
        %v2361 = vunpack.c.h.b16 %v2306
        %v2362 = vunpack.c.l.b16 %v2307
        %v2363 = vunpack.c.h.b16 %v2307
        %v2364 = vunpack.c.l.b16 %v2308
        %v2365 = vunpack.c.h.b16 %v2308
        %v2366 = vunpack.c.l.b16 %v2309
        %v2367 = vunpack.c.h.b16 %v2309
        %v2368 = vunpack.c.l.b16 %v2310
        %v2369 = vunpack.c.h.b16 %v2310
        %v2370 = vunpack.c.l.b16 %v2311
        %v2371 = vunpack.c.h.b16 %v2311
        %v2372 = vunpack.c.l.b16 %v2312
        %v2373 = vunpack.c.h.b16 %v2312
        %v2374 = vunpack.c.l.b16 %v2313
        %v2375 = vunpack.c.h.b16 %v2313
        %v2376 = vunpack.c.l.b16 %v2314
        %v2377 = vunpack.c.h.b16 %v2314
        %v2378 = vunpack.c.l.b16 %v2315
        %v2379 = vunpack.c.h.b16 %v2315
        %v2380 = vunpack.c.l.b16 %v2316
        %v2381 = vunpack.c.h.b16 %v2316
        %v2382 = vunpack.c.l.b16 %v2317
        %v2383 = vunpack.c.h.b16 %v2317
        %v2384 = vunpack.c.l.b16 %v2318
        %v2385 = vunpack.c.h.b16 %v2318
        %v2386 = vunpack.c.l.b16 %v2319
        %v2387 = vunpack.c.h.b16 %v2319
        %v2388 = vunpack.c.l.b16 %v2320
        %v2389 = vunpack.c.h.b16 %v2320
        %v2390 = vpack.c.b16 %v2360, %v2358
        %v2391 = vpack.c.b16 %v2361, %v2359
        %v2392 = vpack.c.b16 %v2364, %v2362
        %v2393 = vpack.c.b16 %v2365, %v2363
        %v2394 = vpack.c.b16 %v2368, %v2366
        %v2395 = vpack.c.b16 %v2369, %v2367
        %v2396 = vpack.c.b16 %v2372, %v2370
        %v2397 = vpack.c.b16 %v2373, %v2371
        %v2398 = vpack.c.b16 %v2376, %v2374
        %v2399 = vpack.c.b16 %v2377, %v2375
        %v2400 = vpack.c.b16 %v2380, %v2378
        %v2401 = vpack.c.b16 %v2381, %v2379
        %v2402 = vpack.c.b16 %v2384, %v2382
        %v2403 = vpack.c.b16 %v2385, %v2383
        %v2404 = vpack.c.b16 %v2388, %v2386
        %v2405 = vpack.c.b16 %v2389, %v2387
        %2422 = vmatpush.bf16.msra.mxu0 %v2404
        %2423 = vmatpush.bf16.msra.mxu0 %v2402
        %2424 = vmatpush.bf16.msra.mxu0 %v2400
        %2425 = vmatpush.bf16.msra.mxu0 %v2398
        %2426 = vmatpush.bf16.msra.mxu0 %v2396
        %2427 = vmatpush.bf16.msra.mxu0 %v2394
        %2428 = vmatpush.bf16.msra.mxu0 %v2392
        %2429 = vmatpush.bf16.msra.mxu0 %v2390
        %2430 = vmatmul.bf16.gmra.mxu0 %v2340
        %v2431 = vpop.f32.mrf.mxu0
        %v2432 = vadd.f32 0.0, %v2431
        %v2433 = vpop.f32.mrf.mxu0
        %v2434 = vadd.f32 0.0, %v2433
        %2435 = vdwg.mxu0
        %2436 = vmatpush.bf16.msra.mxu0 %v2405
        %2437 = vmatpush.bf16.msra.mxu0 %v2403
        %2438 = vmatpush.bf16.msra.mxu0 %v2401
        %2439 = vmatpush.bf16.msra.mxu0 %v2399
        %2440 = vmatpush.bf16.msra.mxu0 %v2397
        %2441 = vmatpush.bf16.msra.mxu0 %v2395
        %2442 = vmatpush.bf16.msra.mxu0 %v2393
        %2443 = vmatpush.bf16.msra.mxu0 %v2391
        %2444 = vmatmul.bf16.gmra.mxu0 %v2340
        %v2445 = vpop.f32.mrf.mxu0
        %v2446 = vadd.f32 0.0, %v2445
        %v2447 = vpop.f32.mrf.mxu0
        %v2448 = vadd.f32 0.0, %v2447
        %2449 = vdwg.mxu0
        %v2450 = vadd.f32 %v2283, %v2432
        %v2451 = vadd.f32 %v2297, %v2446
        %v2452 = vadd.f32 %v2285, %v2434
        %v2453 = vadd.f32 %v2299, %v2448
        %v2454 = vld [vmem:[%s728] sm:$0xfe]
        %v2455 = vld [vmem:[%s728 + $0x8] sm:$0xfe]
        %v2456 = vld [vmem:[%s728 + $0x10] sm:$0xff]
        %v2457 = vld [vmem:[%s728 + $0x18] sm:$0xff]
        %v2458 = vld [vmem:[%s728 + $0x20] sm:$0x1]
        %v2459 = vld [vmem:[%s728 + $0x28] sm:$0x1]
        %vm2466 = vcmask 1046528
        %v2467 = vrot.slane %v2454, 1
        %v2468 = vrot.slane %v2456, 1
        %v2469 = vsel %vm2466, %v2467, %v2468
        %v2470 = vrot.slane %v2455, 1
        %v2471 = vrot.slane %v2457, 1
        %v2472 = vsel %vm2466, %v2470, %v2471
        %v2473 = vrot.slane %v2458, 1
        %v2474 = vsel %vm2466, %v2468, %v2473
        %v2475 = vrot.slane %v2459, 1
        %v2476 = vsel %vm2466, %v2471, %v2475
        %v2481 = vadd.f32 %v2450, %v2469
        %v2482 = vadd.f32 %v2451, %v2472
        %v2483 = vadd.f32 %v2452, %v2474
        %v2484 = vadd.f32 %v2453, %v2476
        %vm2489 = vcmask 1040384
        %v2490 = vrot.slane %v2481, 7
        %v2491 = vrot.slane %v2482, 7
        %v2492 = vrot.slane %v2483, 7
        %v2493 = vsel %vm2489, %v2490, %v2492
        %v2494 = vrot.slane %v2484, 7
        %v2495 = vsel %vm2489, %v2491, %v2494
        %2502 = vst [vmem:[%s733] sm:$0xfe] %v2490
        %2503 = vst [vmem:[%s733 + $0x8] sm:$0xfe] %v2491
        %2504 = vst [vmem:[%s733 + $0x10] sm:$0xff] %v2493
        %2505 = vst [vmem:[%s733 + $0x18] sm:$0xff] %v2495
        %2506 = vst [vmem:[%s733 + $0x20] sm:$0x1] %v2492
        %2507 = vst [vmem:[%s733 + $0x28] sm:$0x1] %v2494
        %p2508 = scmp.lt.s32.totalorder %s35, 1
        %s2509 = scalar_select %p2508, %s35, 1
        %s2510 = smul.addr %s2509, 6
        %s2511 = smul.addr %s2510, 8
        %s2512 = scalar_lea.vmem %s22, %s2511
        // Predicated region
        $region121: #{tpu_custom_call.1} parent=107 // pred_check
          %p2513 = pneg %p520
        $region122: #{tpu_custom_call.1} parent=107 // pred_check_branch
          %2515 = sbr.rel (%p2513) target = $region124
        $region123: #{tpu_custom_call.1} parent=107 // pred_region
          _
        $region124: #{tpu_custom_call.1} parent=107 // pred_fallthru
          _
      $region108: #{tpu_custom_call.1} parent=5 // pred_fallthru
        _
      %p2516 = scmp.le.s32.totalorder 2, %s30
      // Predicated region
      $region125: #{tpu_custom_call.1} parent=5 // pred_check
        %p2517 = pneg %p2516
      $region126: #{tpu_custom_call.1} parent=5 // pred_check_branch
        %2519 = sbr.rel (%p2517) target = $region128
      $region127: #{tpu_custom_call.1} parent=5 // pred_region
        %s2520 = ssub.s32 %s30, 2
        // Predicated region
        $region129: #{tpu_custom_call.1} parent=127 // pred_check
          %p2521 = pneg %p526
        $region130: #{tpu_custom_call.1} parent=127 // pred_check_branch
          %2523 = sbr.rel (%p2521) target = $region132
        $region131: #{tpu_custom_call.1} parent=127 // pred_region
          %p2524 = scmp.lt.s32.totalorder %s36, 1
          %s2525 = scalar_select %p2524, %s36, 1
          %s2526 = smul.addr %s2525, 6
          %s2527 = smul.addr %s2526, 8
          %s2528 = scalar_lea.vmem %s22, %s2527
        $region132: #{tpu_custom_call.1} parent=127 // pred_fallthru
          _
      $region128: #{tpu_custom_call.1} parent=5 // pred_fallthru
        _
    $region6: #{tpu_custom_call.1} parent=1 // loop_footer
      %s34 = sadd.s32 1, %s30
    $region7: #{tpu_custom_call.1} parent=1 // loop_footer_branch
      %29 = sbr.rel target = $region3
    $region8: #{tpu_custom_call.1} parent=1 // loop_exit
      _
    %2529 = vsyncpa [#allocation7], 1
    %s2530 = scalar_lea.sflag [#allocation7], 1
    %2531 = vsyncpa %s2530, 1
    %2532 = vsyncpa [#allocation9], 1

</llo_original>
